<compile_context>
chip_gen: v6e
topology: v6e:2x2x1
jax: 0.10.0
libtpu: 0.0.40
codegen_flags: <defaults>
</compile_context>

<pallas_src>
import functools

import jax
import jax.numpy as jnp
from jax import lax
from jax.experimental import pallas as pl
from jax.experimental.pallas import tpu as pltpu


# lhs @ rhs^T : contract dim 1 with dim 1 (the flash-attention NT form).
_NT = (((1,), (1,)), ((), ()))

_DEFAULT_VMEM_CAPACITY = 128 * 2**20     # v5e / v6e; v7x reports 64 MiB


def _att_kernel(x_ref, wqt_ref, bq_ref, wk_ref, bk_ref, wv_ref, bv_ref,
                gp_ref, gc_ref, o_ref, kq_scr, bqk_scr, v_scr, ca_scr,
                *, mxu_dtype, hw_valid):
    f32 = jnp.float32
    qi = pl.program_id(1)
    tq = o_ref.shape[2]
    hwp = kq_scr.shape[1]

    # ---------------- per-batch precompute (q-tile is the inner "arbitrary" axis) --------
    @pl.when(qi == 0)
    def _():
        xm = x_ref[0].astype(mxu_dtype)                                     # (C, HWp)
        # key projection (1x1 conv == channel matmul), kept only transiently
        k = (jnp.dot(wk_ref[...].astype(mxu_dtype), xm,
                     preferred_element_type=f32) + bk_ref[...])             # (C8, HWp) f32
        km = k.astype(mxu_dtype)
        # fold the query projection into the keys:
        #   energy = x^T (Wq^T k) + bq^T k
        kq_scr[...] = jnp.dot(wqt_ref[...].astype(mxu_dtype), km,
                              preferred_element_type=f32).astype(kq_scr.dtype)
        bqk_scr[...] = jnp.sum(bq_ref[...] * k, axis=0, keepdims=True)      # (1, HWp) f32
        # value projection
        v_scr[...] = (jnp.dot(wv_ref[...].astype(mxu_dtype), xm,
                              preferred_element_type=f32)
                      + bv_ref[...]).astype(v_scr.dtype)                    # (C, HWp)
        # CAM channel attention: softmax(rowmax(e) - e) == exp(rowmin(e) - e) / sum
        # (zero-padded spatial columns contribute nothing to e, so no mask needed)
        e = lax.dot_general(xm, xm, _NT, preferred_element_type=f32)        # (C, C)
        pe = jnp.exp(jnp.min(e, axis=-1, keepdims=True) - e)
        ca_scr[...] = (pe * pl.reciprocal(jnp.sum(pe, axis=-1, keepdims=True),
                                          approx=True)).astype(ca_scr.dtype)

    # ---------------- PAM (position attention) for this query tile ----------------------
    start = pl.multiple_of(qi * tq, tq)
    x_t = x_ref[0, :, pl.ds(start, tq)].astype(f32)                         # (C, TQ)
    x_tm = x_t.astype(mxu_dtype)
    xt_m = jnp.transpose(x_t).astype(mxu_dtype)                             # (TQ, C) small

    # energy = x^T (Wq^T k) + bq^T k        (query projection folded per batch)
    energy = jnp.dot(xt_m, kq_scr[...],
                     preferred_element_type=f32) + bqk_scr[...]             # (TQ, HWp)
    if hw_valid < hwp:                 # mask lane-padded key columns (static branch)
        col = lax.broadcasted_iota(jnp.int32, energy.shape, 1)
        energy = jnp.where(col < hw_valid, energy, -1e30)
    energy = energy - jnp.max(energy, axis=-1, keepdims=True)
    p = jnp.exp(energy)
    p_m = p.astype(mxu_dtype)

    # Deferred softmax normalization: normalize the (C, TQ) result, not the
    # (TQ, HWp) weights.  Row sums via a tiny MXU matmul (no XLU reduce/relayout).
    row_sum = lax.dot_general(jnp.ones((1, hwp), mxu_dtype), p_m, _NT,
                              preferred_element_type=f32)                   # (1, TQ)
    inv = pl.reciprocal(row_sum, approx=True)
    out_pam = lax.dot_general(v_scr[...], p_m, _NT,
                              preferred_element_type=f32)                   # (C, TQ)

    gp = gp_ref[0, 0]
    gc = gc_ref[0, 0]
    pam = gp * (out_pam * inv) + x_t

    # ---------------- CAM (channel attention) for this query tile -----------------------
    out_cam = jnp.dot(ca_scr[...], x_tm, preferred_element_type=f32)        # (C, TQ)
    cam = gc * out_cam + x_t

    # ---------------- gate + residual ----------------------------------------------------
    w = jax.nn.sigmoid(pam + cam)
    o_ref[0] = (x_t + x_t * w).astype(o_ref.dtype)


def _vmem_bytes_estimate(C, C8, HWp, tq, x_bytes, mxu_bytes, x_buffers):
    """Rough upper bound on simultaneously-live VMEM for one grid step."""
    x_slab = x_buffers * C * HWp * x_bytes                   # resident input slab
    out_blk = 2 * C * tq * x_bytes                           # double-buffered output tile
    weights = 2 * (2 * C8 * C + C * C + 2 * C8 + C) * 4      # double-buffered params
    scratch = (2 * C * HWp + C * C) * mxu_bytes + 8 * HWp * 4
    # per-tile temporaries (energy/p + bf16 copy + a few (C,tq) f32 values) and the
    # per-batch precompute temporaries (xm, k, e/pe).
    tmps = (2 * tq * HWp * 4 + tq * HWp * mxu_bytes + 8 * C * tq * 4
            + C * HWp * mxu_bytes + 2 * C8 * HWp * 4 + 2 * C * C * 4)
    return x_slab + out_blk + weights + scratch + tmps


def _pick_tq(C, C8, HWp, x_bytes, mxu_bytes, budget, x_buffers):
    for cand in (1024, 512, 256, 128):
        if cand <= HWp and HWp % cand == 0:
            if _vmem_bytes_estimate(C, C8, HWp, cand, x_bytes, mxu_bytes,
                                    x_buffers) <= budget:
                return cand
    return 128    # best effort; see TODO(synk) on key-axis tiling above


@functools.partial(jax.jit, static_argnames=("tq", "mxu_dtype"))
def att_forward(x, wq, bq, wk, bk, wv, bv, gamma_p, gamma_c, *,
                tq=None, mxu_dtype=jnp.bfloat16):
    N, C, H, W = x.shape
    HW = H * W
    C8 = wq.shape[0]
    HWp = ((HW + 127) // 128) * 128            # lane-pad the spatial axis
    x3 = x.reshape(N, C, HW)
    if HWp != HW:
        x3 = jnp.pad(x3, ((0, 0), (0, 0), (0, HWp - HW)))
    wqt = jnp.transpose(wq)                    # (C, C8): kernel consumes Wq^T directly

    x_bytes = jnp.dtype(x.dtype).itemsize
    mxu_bytes = jnp.dtype(mxu_dtype).itemsize

    try:
        vmem_cap = int(pltpu.get_tpu_info().vmem_capacity_bytes)
    except Exception:
        vmem_cap = _DEFAULT_VMEM_CAPACITY
    budget = int(vmem_cap * 0.78)              # ~100 MiB on 128 MiB parts, ~50 MiB on v7x

    # v7x-class parts (64 MiB VMEM): single-buffer the resident x slab when
    # double-buffering it would not leave room for a >=256-wide query tile.
    single_buffer_x = (
        vmem_cap <= 80 * 2**20
        and _vmem_bytes_estimate(C, C8, HWp, min(256, HWp),
                                 x_bytes, mxu_bytes, 2) > budget)
    x_buffers = 1 if single_buffer_x else 2

    if tq is None:
        tq = _pick_tq(C, C8, HWp, x_bytes, mxu_bytes, budget, x_buffers)
    assert HWp % tq == 0, "padded H*W must be divisible by the query-tile size"
    num_q = HWp // tq

    est = _vmem_bytes_estimate(C, C8, HWp, tq, x_bytes, mxu_bytes, x_buffers)
    vmem_limit = int(min(max(int(1.5 * est), 32 * 2**20), budget))

    x_index_map = lambda b, q: (b, 0, 0)
    if single_buffer_x and hasattr(pl, "Buffered"):
        x_spec = pl.BlockSpec((1, C, HWp), x_index_map,
                              pipeline_mode=pl.Buffered(1))
    else:
        x_spec = pl.BlockSpec((1, C, HWp), x_index_map)

    flops = int(2 * N * ((4 * C8 * C + 3 * C * C) * HWp
                         + (2 * C + 1) * HWp * HWp))
    transcendentals = int(N * (HWp * HWp + C * C))
    bytes_accessed = int(x_bytes * 2 * N * C * HW
                         + 4 * (2 * C8 * C + C * C + 2 * C8 + C + 2))

    kernel = functools.partial(_att_kernel, mxu_dtype=mxu_dtype, hw_valid=HW)

    out = pl.pallas_call(
        kernel,
        out_shape=jax.ShapeDtypeStruct((N, C, HWp), x.dtype),
        grid_spec=pltpu.PrefetchScalarGridSpec(
            num_scalar_prefetch=0,
            grid=(N, num_q),
            in_specs=[
                x_spec,                                                # x (resident/batch)
                pl.BlockSpec((C, C8), lambda b, q: (0, 0)),            # Wq^T
                pl.BlockSpec((C8, 1), lambda b, q: (0, 0)),            # bq
                pl.BlockSpec((C8, C), lambda b, q: (0, 0)),            # Wk
                pl.BlockSpec((C8, 1), lambda b, q: (0, 0)),            # bk
                pl.BlockSpec((C, C), lambda b, q: (0, 0)),             # Wv
                pl.BlockSpec((C, 1), lambda b, q: (0, 0)),             # bv
                pl.BlockSpec(memory_space=pltpu.MemorySpace.SMEM),     # gamma_pam
                pl.BlockSpec(memory_space=pltpu.MemorySpace.SMEM),     # gamma_cam
            ],
            out_specs=pl.BlockSpec((1, C, tq), lambda b, q: (b, 0, q)),
            scratch_shapes=[
                pltpu.VMEM((C, HWp), mxu_dtype),     # kq  = Wq^T (Wk x + bk)
                pltpu.VMEM((1, HWp), jnp.float32),   # bqk = bq^T (Wk x + bk)
                pltpu.VMEM((C, HWp), mxu_dtype),     # v   = Wv x + bv
                pltpu.VMEM((C, C), mxu_dtype),       # CAM channel attention
            ],
        ),
        compiler_params=pltpu.CompilerParams(
            dimension_semantics=("parallel", "arbitrary"),
            vmem_limit_bytes=vmem_limit),
        cost_estimate=pl.CostEstimate(flops=flops,
                                      transcendentals=transcendentals,
                                      bytes_accessed=bytes_accessed),
    )(x3, wqt, bq, wk, bk, wv, bv, gamma_p, gamma_c)
    return out[:, :, :HW].reshape(N, C, H, W)


def att_reference(x, wq, bq, wk, bk, wv, bv, gamma_p, gamma_c, operand_dtype=None):
    """Pure-JAX reference mirroring the PyTorch forward.  If operand_dtype is set,
    matmul operands are rounded to that dtype (f32 accumulation), matching the
    kernel's MXU numerics."""
    N, C, H, W = x.shape
    HW = H * W
    f32 = jnp.float32
    hi = lax.Precision.HIGHEST
    x3 = x.reshape(N, C, HW)
    md = f32 if operand_dtype is None else operand_dtype
    xm = x3.astype(md)
    x3f = x3.astype(f32)

    # PAM
    q = jnp.einsum('oc,ncl->nol', wq.astype(md), xm, precision=hi,
                   preferred_element_type=f32) + bq[None]
    k = jnp.einsum('oc,ncl->nol', wk.astype(md), xm, precision=hi,
                   preferred_element_type=f32) + bk[None]
    v = jnp.einsum('oc,ncl->nol', wv.astype(md), xm, precision=hi,
                   preferred_element_type=f32) + bv[None]
    energy = jnp.einsum('ncl,ncm->nlm', q.astype(md), k.astype(md), precision=hi,
                        preferred_element_type=f32)
    attn = jax.nn.softmax(energy, axis=-1)
    out_pam = jnp.einsum('ncm,nlm->ncl', v.astype(md), attn.astype(md), precision=hi,
                         preferred_element_type=f32)
    pam = gamma_p[0, 0] * out_pam + x3f

    # CAM
    e = jnp.einsum('ncl,ndl->ncd', xm, xm, precision=hi, preferred_element_type=f32)
    e = jnp.max(e, axis=-1, keepdims=True) - e
    attn_c = jax.nn.softmax(e, axis=-1)
    out_cam = jnp.einsum('ncd,ndl->ncl', attn_c.astype(md), xm, precision=hi,
                         preferred_element_type=f32)
    cam = gamma_c[0, 0] * out_cam + x3f

    w = jax.nn.sigmoid(pam + cam)
    return (x3f + x3f * w).reshape(N, C, H, W).astype(x.dtype)


if __name__ == "__main__":
    N, C, H, W = 2, 64, 16, 16
    C8 = C // 8

    key = jax.random.PRNGKey(0)
    kx, kwq, kbq, kwk, kbk, kwv, kbv = jax.random.split(key, 7)

    x = jax.random.normal(kx, (N, C, H, W), dtype=jnp.float32)
    # 1x1-conv weights (out_ch, in_ch); biases kept 2-D (out_ch, 1) for the kernel.
    wq = jax.random.normal(kwq, (C8, C), dtype=jnp.float32) * 0.1
    bq = jax.random.normal(kbq, (C8, 1), dtype=jnp.float32) * 0.1
    wk = jax.random.normal(kwk, (C8, C), dtype=jnp.float32) * 0.1
    bk = jax.random.normal(kbk, (C8, 1), dtype=jnp.float32) * 0.1
    wv = jax.random.normal(kwv, (C, C), dtype=jnp.float32) * 0.1
    bv = jax.random.normal(kbv, (C, 1), dtype=jnp.float32) * 0.1
    # PyTorch inits gamma to 0 (making PAM/CAM the identity); use nonzero values so
    # the attention paths are actually exercised.
    gamma_p = jnp.full((1, 1), 0.5, dtype=jnp.float32)
    gamma_c = jnp.full((1, 1), 0.5, dtype=jnp.float32)

    args = (x, wq, bq, wk, bk, wv, bv, gamma_p, gamma_c)
    ref_f32 = att_reference(*args)

    # 1) exact-operand (f32 MXU) path, 2 query tiles of 128 lanes.
    out_f32 = jax.block_until_ready(att_forward(*args, tq=128, mxu_dtype=jnp.float32))
    assert out_f32.shape == (N, C, H, W)
    err = float(jnp.max(jnp.abs(out_f32 - ref_f32)))
    assert jnp.allclose(out_f32, ref_f32, rtol=5e-3, atol=5e-3), err

    # 2) default path: bf16 MXU operands (f32 accumulation), auto tile size,
    #    compared against a reference with the same operand rounding.
    out_bf = jax.block_until_ready(att_forward(*args))
    ref_bf = att_reference(*args, operand_dtype=jnp.bfloat16)
    err_bf = float(jnp.max(jnp.abs(out_bf - ref_bf)))
    assert jnp.allclose(out_bf, ref_bf, rtol=3e-2, atol=3e-2), err_bf

    # 3) lane-ragged spatial size (H*W not a multiple of 128 -> internal
    #    zero-padding + key-column masking inside the kernel).
    H2, W2 = 10, 12
    x2 = jax.random.normal(kx, (N, C, H2, W2), dtype=jnp.float32)
    args2 = (x2,) + args[1:]
    out2 = jax.block_until_ready(att_forward(*args2))
    ref2 = att_reference(*args2, operand_dtype=jnp.bfloat16)
    err2 = float(jnp.max(jnp.abs(out2 - ref2)))
    assert out2.shape == (N, C, H2, W2)
    assert jnp.allclose(out2, ref2, rtol=3e-2, atol=3e-2), err2

    print("KERNEL_OK")
</pallas_src>

<mosaic_0001>
module attributes {stable_mosaic.version = 11 : i64} {
  func.func @_att_kernel(%arg0: i32, %arg1: i32, %arg2: memref<1x64x256xf32, #tpu.memory_space<vmem>>, %arg3: memref<64x8xf32, #tpu.memory_space<vmem>>, %arg4: memref<8x1xf32, #tpu.memory_space<vmem>>, %arg5: memref<8x64xf32, #tpu.memory_space<vmem>>, %arg6: memref<8x1xf32, #tpu.memory_space<vmem>>, %arg7: memref<64x64xf32, #tpu.memory_space<vmem>>, %arg8: memref<64x1xf32, #tpu.memory_space<vmem>>, %arg9: memref<1x1xf32, #tpu.memory_space<smem>>, %arg10: memref<1x1xf32, #tpu.memory_space<smem>>, %arg11: memref<1x64x128xf32, #tpu.memory_space<vmem>>, %arg12: memref<64x256xf32, #tpu.memory_space<vmem>>, %arg13: memref<1x256xf32, #tpu.memory_space<vmem>>, %arg14: memref<64x256xf32, #tpu.memory_space<vmem>>, %arg15: memref<64x64xf32, #tpu.memory_space<vmem>>) attributes {dimension_semantics = [#tpu.dimension_semantics<parallel>, #tpu.dimension_semantics<arbitrary>], iteration_bounds = array<i64: 2, 2>, scalar_prefetch = 0 : i64, scratch_operands = 4 : i64, tpu.core_type = #tpu.core_type<tc>, window_params = [{transform_indices = @transform_0, window_bounds = array<i64: 1, 64, 256>}, {pipeline_mode = #tpu.pipeline_mode<synchronous>, transform_indices = @transform_1, window_bounds = array<i64: 64, 8>}, {pipeline_mode = #tpu.pipeline_mode<synchronous>, transform_indices = @transform_2, window_bounds = array<i64: 8, 1>}, {pipeline_mode = #tpu.pipeline_mode<synchronous>, transform_indices = @transform_3, window_bounds = array<i64: 8, 64>}, {pipeline_mode = #tpu.pipeline_mode<synchronous>, transform_indices = @transform_4, window_bounds = array<i64: 8, 1>}, {pipeline_mode = #tpu.pipeline_mode<synchronous>, transform_indices = @transform_5, window_bounds = array<i64: 64, 64>}, {pipeline_mode = #tpu.pipeline_mode<synchronous>, transform_indices = @transform_6, window_bounds = array<i64: 64, 1>}, {transform_indices = @transform_7, window_bounds = array<i64: 1, 1>}, {transform_indices = @transform_8, window_bounds = array<i64: 1, 1>}, {transform_indices = @transform_9, window_bounds = array<i64: 1, 64, 128>}]} {
    %c0_i32 = arith.constant 0 : i32
    %0 = arith.cmpi eq, %arg1, %c0_i32 : i32
    %1 = arith.extui %0 : i1 to i32
    %c0_i32_0 = arith.constant 0 : i32
    %2 = arith.cmpi ne, %1, %c0_i32_0 : i32
    scf.if %2 {
      %c0_23 = arith.constant 0 : index
      %c0_24 = arith.constant 0 : index
      %c0_25 = arith.constant 0 : index
      %47 = vector.load %arg2[%c0_23, %c0_24, %c0_25] : memref<1x64x256xf32, #tpu.memory_space<vmem>>, vector<1x64x256xf32>
      %48 = vector.shape_cast %47 : vector<1x64x256xf32> to vector<64x256xf32>
      %c0_26 = arith.constant 0 : index
      %c0_27 = arith.constant 0 : index
      %49 = vector.load %arg5[%c0_26, %c0_27] : memref<8x64xf32, #tpu.memory_space<vmem>>, vector<8x64xf32>
      %cst_28 = arith.constant dense<0.000000e+00> : vector<8x256xf32>
      %50 = tpu.matmul %49, %48, %cst_28 {dimension_numbers = #tpu.dot_dimension_numbers<[1], [0], [0], [1], [0, 0, 1, 1], [], []>} : vector<8x64xf32>, vector<64x256xf32>, vector<8x256xf32> -> vector<8x256xf32>
      %c0_29 = arith.constant 0 : index
      %c0_30 = arith.constant 0 : index
      %51 = vector.load %arg6[%c0_29, %c0_30] : memref<8x1xf32, #tpu.memory_space<vmem>>, vector<8x1xf32>
      %52 = vector.broadcast %51 : vector<8x1xf32> to vector<8x256xf32>
      %53 = arith.addf %50, %52 : vector<8x256xf32>
      %c0_31 = arith.constant 0 : index
      %c0_32 = arith.constant 0 : index
      %54 = vector.load %arg3[%c0_31, %c0_32] : memref<64x8xf32, #tpu.memory_space<vmem>>, vector<64x8xf32>
      %cst_33 = arith.constant dense<0.000000e+00> : vector<64x256xf32>
      %55 = tpu.matmul %54, %53, %cst_33 {dimension_numbers = #tpu.dot_dimension_numbers<[1], [0], [0], [1], [0, 0, 1, 1], [], []>} : vector<64x8xf32>, vector<8x256xf32>, vector<64x256xf32> -> vector<64x256xf32>
      %c0_34 = arith.constant 0 : index
      %c0_35 = arith.constant 0 : index
      %56 = vector.load %arg12[%c0_34, %c0_35] : memref<64x256xf32, #tpu.memory_space<vmem>>, vector<64x256xf32>
      tpu.vector_store %arg12[%c0_34, %c0_35], %55 {strides = array<i32>} : memref<64x256xf32, #tpu.memory_space<vmem>>, vector<64x256xf32>,
      %c0_36 = arith.constant 0 : index
      %c0_37 = arith.constant 0 : index
      %57 = vector.load %arg4[%c0_36, %c0_37] : memref<8x1xf32, #tpu.memory_space<vmem>>, vector<8x1xf32>
      %58 = vector.broadcast %57 : vector<8x1xf32> to vector<8x256xf32>
      %59 = arith.mulf %58, %53 : vector<8x256xf32>
      %cst_38 = arith.constant dense<0.000000e+00> : vector<256xf32>
      %60 = vector.multi_reduction <add>, %59, %cst_38 [0] : vector<8x256xf32> to vector<256xf32>
      %61 = vector.shape_cast %60 : vector<256xf32> to vector<1x256xf32>
      %c0_39 = arith.constant 0 : index
      %c0_40 = arith.constant 0 : index
      %62 = vector.load %arg13[%c0_39, %c0_40] : memref<1x256xf32, #tpu.memory_space<vmem>>, vector<1x256xf32>
      tpu.vector_store %arg13[%c0_39, %c0_40], %61 {strides = array<i32>} : memref<1x256xf32, #tpu.memory_space<vmem>>, vector<1x256xf32>,
      %c0_41 = arith.constant 0 : index
      %c0_42 = arith.constant 0 : index
      %63 = vector.load %arg7[%c0_41, %c0_42] : memref<64x64xf32, #tpu.memory_space<vmem>>, vector<64x64xf32>
      %cst_43 = arith.constant dense<0.000000e+00> : vector<64x256xf32>
      %64 = tpu.matmul %63, %48, %cst_43 {dimension_numbers = #tpu.dot_dimension_numbers<[1], [0], [0], [1], [0, 0, 1, 1], [], []>} : vector<64x64xf32>, vector<64x256xf32>, vector<64x256xf32> -> vector<64x256xf32>
      %c0_44 = arith.constant 0 : index
      %c0_45 = arith.constant 0 : index
      %65 = vector.load %arg8[%c0_44, %c0_45] : memref<64x1xf32, #tpu.memory_space<vmem>>, vector<64x1xf32>
      %66 = vector.broadcast %65 : vector<64x1xf32> to vector<64x256xf32>
      %67 = arith.addf %64, %66 : vector<64x256xf32>
      %c0_46 = arith.constant 0 : index
      %c0_47 = arith.constant 0 : index
      %68 = vector.load %arg14[%c0_46, %c0_47] : memref<64x256xf32, #tpu.memory_space<vmem>>, vector<64x256xf32>
      tpu.vector_store %arg14[%c0_46, %c0_47], %67 {strides = array<i32>} : memref<64x256xf32, #tpu.memory_space<vmem>>, vector<64x256xf32>,
      %cst_48 = arith.constant dense<0.000000e+00> : vector<64x64xf32>
      %69 = tpu.matmul %48, %48, %cst_48 {dimension_numbers = #tpu.dot_dimension_numbers<[1], [1], [0], [0], [0, 0, 1, 0], [], []>} : vector<64x256xf32>, vector<64x256xf32>, vector<64x64xf32> -> vector<64x64xf32>
      %cst_49 = arith.constant dense<0x7F800000> : vector<64xf32>
      %70 = vector.multi_reduction <minimumf>, %69, %cst_49 [1] : vector<64x64xf32> to vector<64xf32>
      %71 = vector.shape_cast %70 : vector<64xf32> to vector<64x1xf32>
      %72 = vector.broadcast %71 : vector<64x1xf32> to vector<64x64xf32>
      %73 = arith.subf %72, %69 : vector<64x64xf32>
      %74 = math.exp %73 : vector<64x64xf32>
      %cst_50 = arith.constant dense<0.000000e+00> : vector<64xf32>
      %75 = vector.multi_reduction <add>, %74, %cst_50 [1] : vector<64x64xf32> to vector<64xf32>
      %76 = vector.shape_cast %75 : vector<64xf32> to vector<64x1xf32>
      %77 = tpu.reciprocal %76 {approx = true} : vector<64x1xf32> -> vector<64x1xf32>
      %78 = vector.broadcast %77 : vector<64x1xf32> to vector<64x64xf32>
      %79 = arith.mulf %74, %78 : vector<64x64xf32>
      %c0_51 = arith.constant 0 : index
      %c0_52 = arith.constant 0 : index
      %80 = vector.load %arg15[%c0_51, %c0_52] : memref<64x64xf32, #tpu.memory_space<vmem>>, vector<64x64xf32>
      tpu.vector_store %arg15[%c0_51, %c0_52], %79 {strides = array<i32>} : memref<64x64xf32, #tpu.memory_space<vmem>>, vector<64x64xf32>,
    } else {
    }
    %c128_i32 = arith.constant 128 : i32
    %3 = arith.muli %arg1, %c128_i32 : i32
    %4 = tpu.assume_multiple %3, 128 : i32
    %c0 = arith.constant 0 : index
    %c0_1 = arith.constant 0 : index
    %5 = arith.index_cast %4 : i32 to index
    %6 = vector.load %arg2[%c0, %c0_1, %5] : memref<1x64x256xf32, #tpu.memory_space<vmem>>, vector<1x64x128xf32>
    %7 = vector.shape_cast %6 : vector<1x64x128xf32> to vector<64x128xf32>
    %8 = tpu.transpose %7, [1, 0] : vector<64x128xf32> -> vector<128x64xf32>
    %c0_2 = arith.constant 0 : index
    %c0_3 = arith.constant 0 : index
    %9 = vector.load %arg12[%c0_2, %c0_3] : memref<64x256xf32, #tpu.memory_space<vmem>>, vector<64x256xf32>
    %cst = arith.constant dense<0.000000e+00> : vector<128x256xf32>
    %10 = tpu.matmul %8, %9, %cst {dimension_numbers = #tpu.dot_dimension_numbers<[1], [0], [0], [1], [0, 0, 1, 1], [], []>} : vector<128x64xf32>, vector<64x256xf32>, vector<128x256xf32> -> vector<128x256xf32>
    %c0_4 = arith.constant 0 : index
    %c0_5 = arith.constant 0 : index
    %11 = vector.load %arg13[%c0_4, %c0_5] : memref<1x256xf32, #tpu.memory_space<vmem>>, vector<1x256xf32>
    %12 = vector.broadcast %11 : vector<1x256xf32> to vector<128x256xf32>
    %13 = arith.addf %10, %12 : vector<128x256xf32>
    %cst_6 = arith.constant dense<0xFF800000> : vector<128xf32>
    %14 = vector.multi_reduction <maximumf>, %13, %cst_6 [1] : vector<128x256xf32> to vector<128xf32>
    %15 = vector.shape_cast %14 : vector<128xf32> to vector<128x1xf32>
    %16 = vector.broadcast %15 : vector<128x1xf32> to vector<128x256xf32>
    %17 = arith.subf %13, %16 : vector<128x256xf32>
    %18 = math.exp %17 : vector<128x256xf32>
    %cst_7 = arith.constant 1.000000e+00 : f32
    %19 = vector.broadcast %cst_7 : f32 to vector<1x256xf32>
    %cst_8 = arith.constant dense<0.000000e+00> : vector<1x128xf32>
    %20 = tpu.matmul %19, %18, %cst_8 {dimension_numbers = #tpu.dot_dimension_numbers<[1], [1], [0], [0], [0, 0, 1, 0], [], []>} : vector<1x256xf32>, vector<128x256xf32>, vector<1x128xf32> -> vector<1x128xf32>
    %21 = tpu.reciprocal %20 {approx = true} : vector<1x128xf32> -> vector<1x128xf32>
    %c0_9 = arith.constant 0 : index
    %c0_10 = arith.constant 0 : index
    %22 = vector.load %arg14[%c0_9, %c0_10] : memref<64x256xf32, #tpu.memory_space<vmem>>, vector<64x256xf32>
    %cst_11 = arith.constant dense<0.000000e+00> : vector<64x128xf32>
    %23 = tpu.matmul %22, %18, %cst_11 {dimension_numbers = #tpu.dot_dimension_numbers<[1], [1], [0], [0], [0, 0, 1, 0], [], []>} : vector<64x256xf32>, vector<128x256xf32>, vector<64x128xf32> -> vector<64x128xf32>
    %c0_12 = arith.constant 0 : index
    %c0_13 = arith.constant 0 : index
    %24 = memref.load %arg9[%c0_12, %c0_13] : memref<1x1xf32, #tpu.memory_space<smem>>
    %c0_14 = arith.constant 0 : index
    %c0_15 = arith.constant 0 : index
    %25 = memref.load %arg10[%c0_14, %c0_15] : memref<1x1xf32, #tpu.memory_space<smem>>
    %26 = vector.broadcast %21 : vector<1x128xf32> to vector<64x128xf32>
    %27 = arith.mulf %23, %26 : vector<64x128xf32>
    %28 = vector.broadcast %24 : f32 to vector<64x128xf32>
    %29 = arith.mulf %28, %27 : vector<64x128xf32>
    %30 = arith.addf %29, %7 : vector<64x128xf32>
    %c0_16 = arith.constant 0 : index
    %c0_17 = arith.constant 0 : index
    %31 = vector.load %arg15[%c0_16, %c0_17] : memref<64x64xf32, #tpu.memory_space<vmem>>, vector<64x64xf32>
    %cst_18 = arith.constant dense<0.000000e+00> : vector<64x128xf32>
    %32 = tpu.matmul %31, %7, %cst_18 {dimension_numbers = #tpu.dot_dimension_numbers<[1], [0], [0], [1], [0, 0, 1, 1], [], []>} : vector<64x64xf32>, vector<64x128xf32>, vector<64x128xf32> -> vector<64x128xf32>
    %33 = vector.broadcast %25 : f32 to vector<64x128xf32>
    %34 = arith.mulf %33, %32 : vector<64x128xf32>
    %35 = arith.addf %34, %7 : vector<64x128xf32>
    %36 = arith.addf %30, %35 : vector<64x128xf32>
    %37 = arith.negf %36 : vector<64x128xf32>
    %38 = math.exp %37 : vector<64x128xf32>
    %cst_19 = arith.constant 1.000000e+00 : f32
    %39 = vector.broadcast %cst_19 : f32 to vector<64x128xf32>
    %40 = arith.addf %39, %38 : vector<64x128xf32>
    %41 = arith.divf %39, %40 : vector<64x128xf32>
    %42 = arith.mulf %7, %41 : vector<64x128xf32>
    %43 = arith.addf %7, %42 : vector<64x128xf32>
    %c0_20 = arith.constant 0 : index
    %c0_21 = arith.constant 0 : index
    %c0_22 = arith.constant 0 : index
    %44 = vector.load %arg11[%c0_20, %c0_21, %c0_22] : memref<1x64x128xf32, #tpu.memory_space<vmem>>, vector<1x64x128xf32>
    %45 = vector.shape_cast %44 : vector<1x64x128xf32> to vector<64x128xf32>
    %46 = vector.shape_cast %43 : vector<64x128xf32> to vector<1x64x128xf32>
    tpu.vector_store %arg11[%c0_20, %c0_21, %c0_22], %46 {strides = array<i32>} : memref<1x64x128xf32, #tpu.memory_space<vmem>>, vector<1x64x128xf32>,
    return
  }
  func.func @transform_0(%arg0: i32, %arg1: i32) -> (i32, i32, i32) {
    %c0_i32 = arith.constant 0 : i32
    %c0_i32_0 = arith.constant 0 : i32
    %c0_i32_1 = arith.constant 0 : i32
    return %arg0, %c0_i32, %c0_i32_0 : i32, i32, i32
  }
  func.func @transform_1(%arg0: i32, %arg1: i32) -> (i32, i32) {
    %c0_i32 = arith.constant 0 : i32
    %c0_i32_0 = arith.constant 0 : i32
    %c0_i32_1 = arith.constant 0 : i32
    return %c0_i32, %c0_i32_0 : i32, i32
  }
  func.func @transform_2(%arg0: i32, %arg1: i32) -> (i32, i32) {
    %c0_i32 = arith.constant 0 : i32
    %c0_i32_0 = arith.constant 0 : i32
    %c0_i32_1 = arith.constant 0 : i32
    return %c0_i32, %c0_i32_0 : i32, i32
  }
  func.func @transform_3(%arg0: i32, %arg1: i32) -> (i32, i32) {
    %c0_i32 = arith.constant 0 : i32
    %c0_i32_0 = arith.constant 0 : i32
    %c0_i32_1 = arith.constant 0 : i32
    return %c0_i32, %c0_i32_0 : i32, i32
  }
  func.func @transform_4(%arg0: i32, %arg1: i32) -> (i32, i32) {
    %c0_i32 = arith.constant 0 : i32
    %c0_i32_0 = arith.constant 0 : i32
    %c0_i32_1 = arith.constant 0 : i32
    return %c0_i32, %c0_i32_0 : i32, i32
  }
  func.func @transform_5(%arg0: i32, %arg1: i32) -> (i32, i32) {
    %c0_i32 = arith.constant 0 : i32
    %c0_i32_0 = arith.constant 0 : i32
    %c0_i32_1 = arith.constant 0 : i32
    return %c0_i32, %c0_i32_0 : i32, i32
  }
  func.func @transform_6(%arg0: i32, %arg1: i32) -> (i32, i32) {
    %c0_i32 = arith.constant 0 : i32
    %c0_i32_0 = arith.constant 0 : i32
    %c0_i32_1 = arith.constant 0 : i32
    return %c0_i32, %c0_i32_0 : i32, i32
  }
  func.func @transform_7(%arg0: i32, %arg1: i32) -> (i32, i32) {
    %c0_i32 = arith.constant 0 : i32
    %c0_i32_0 = arith.constant 0 : i32
    %c0_i32_1 = arith.constant 0 : i32
    return %c0_i32, %c0_i32_0 : i32, i32
  }
  func.func @transform_8(%arg0: i32, %arg1: i32) -> (i32, i32) {
    %c0_i32 = arith.constant 0 : i32
    %c0_i32_0 = arith.constant 0 : i32
    %c0_i32_1 = arith.constant 0 : i32
    return %c0_i32, %c0_i32_0 : i32, i32
  }
  func.func @transform_9(%arg0: i32, %arg1: i32) -> (i32, i32, i32) {
    %c0_i32 = arith.constant 0 : i32
    %c0_i32_0 = arith.constant 0 : i32
    return %arg0, %c0_i32, %arg1 : i32, i32, i32
  }
}

</mosaic_0001>

<llo_original>
// kernel: att_forward.1
$region0: #{att_forward.1}
  #allocation0 [shape = 'u32[]', space=smem, size = 0x4, offset = 0x4, fixed_abs, tag = 'smem constant byte address 0x4 - core index']
  #allocation1 [shape = 'u32[144,128]{1,0:T(1,128)}', space=vmem, size = 0x12000, scoped, tag = 'internal scratch']
  #allocation2 [shape = 'f32[64,256]{1,0:T(8,128)}', space=vmem, size = 0x10000, scoped, tag = 'scratch operand']
  #allocation3 [shape = 'f32[1,256]{1,0:T(1,128)}', space=vmem, size = 0x400, scoped, tag = 'scratch operand']
  #allocation4 [shape = 'f32[64,256]{1,0:T(8,128)}', space=vmem, size = 0x10000, scoped, tag = 'scratch operand']
  #allocation5 [shape = 'f32[64,64]{1,0:T(8,128)}', space=vmem, size = 0x8000, scoped, tag = 'scratch operand']
  #allocation6 [shape = 'f32[1,1]{1,0:T(1,128)S(6)}', space=smem, size = 0x200, scoped, tag = 'scoped memory for att_forward.1']
  #allocation7 [shape = 'f32[1,1]{1,0:T(1,128)S(6)}', space=smem, size = 0x200, scoped, tag = 'scoped memory for att_forward.1']
  %s0 = inlined_call_operand.vmem [shape: f32[2,64,256], index: 0, kind: input, shape index: {}]
  %s1 = inlined_call_operand.vmem [shape: f32[64,8], index: 1, kind: input, shape index: {}]
  %s2 = inlined_call_operand.vmem [shape: f32[8,1], index: 2, kind: input, shape index: {}]
  %s3 = inlined_call_operand.vmem [shape: f32[8,64], index: 3, kind: input, shape index: {}]
  %s4 = inlined_call_operand.vmem [shape: f32[8,1], index: 4, kind: input, shape index: {}]
  %s5 = inlined_call_operand.vmem [shape: f32[64,64], index: 5, kind: input, shape index: {}]
  %s6 = inlined_call_operand.vmem [shape: f32[64,1], index: 6, kind: input, shape index: {}]
  %s7 = inlined_call_operand.<no memory space> [shape: f32[1,1], index: 7, kind: input, shape index: {}]
  %s8 = inlined_call_operand.<no memory space> [shape: f32[1,1], index: 8, kind: input, shape index: {}]
  %s9 = inlined_call_operand.vmem [shape: f32[2,64,256], index: 9, kind: output, shape index: {}]
  %s10 = sld [smem:[#allocation0]]
  $region107: #{att_forward.1} parent=0
    _
  %s12 = ssub.s32 1, %s10
  %s13 = scalar_select 0, %s12, %s10
  %14 = sst [smem:[#allocation6]] %s7
  %15 = sst [smem:[#allocation7]] %s8
  $region1: #{att_forward.1} parent=0
    #allocation8 [shape = 'u8[65536]{0}', space=vmem, size = 0x10000, scoped, tag = 'output window, operand 0']
    loop: start=0, step=1, limit=6
    $region2: #{att_forward.1} parent=1 // loop_pre_header
      _
    $region3: #{att_forward.1} parent=1 // loop_header
      %s17 = sphi 0, %s21
      %p18 = scmp.ge.s32.totalorder %s17, 6
      %s24 = sphi 0, %s36
      %s25 = sphi 0, %s32
      %s26 = sphi 0, %s24
      %s27 = sphi 0, %s25
      %s28 = sphi 0, %s26
      %s29 = sphi 0, %s27
      %s39 = sphi 0, %s41
      %s42 = sphi 0, %s39
      %s43 = sphi 0, %s42
      %s59 = sphi 0, %s43
      %s63 = sphi 0, %s63
      %s65 = sphi 0, %s63
      %s66 = sphi 0, %s65
      %s80 = sphi 0, %s66
      %s84 = sphi 0, %s84
      %s86 = sphi 0, %s84
      %s87 = sphi 0, %s86
      %s101 = sphi 0, %s87
      %s105 = sphi 0, %s105
      %s107 = sphi 0, %s105
      %s108 = sphi 0, %s107
      %s122 = sphi 0, %s108
      %s126 = sphi 0, %s126
      %s128 = sphi 0, %s126
      %s129 = sphi 0, %s128
      %s143 = sphi 0, %s129
      %s147 = sphi 0, %s147
      %s149 = sphi 0, %s147
      %s150 = sphi 0, %s149
      %s164 = sphi 0, %s150
      %s168 = sphi 0, %s168
      %s170 = sphi 0, %s168
      %s171 = sphi 0, %s170
      %s185 = sphi 0, %s171
      %s189 = sphi 0, %s189
      %s191 = sphi 0, %s189
      %s192 = sphi 0, %s191
      %s206 = sphi 0, %s192
      %s210 = sphi 0, %s210
      %s212 = sphi 0, %s210
      %s213 = sphi 0, %s212
      %s227 = sphi 0, %s213
      %s235 = sphi 0, %s237
      %s238 = sphi 0, %s235
      %s239 = sphi 0, %s238
      %s255 = sphi 0, %s239
    $region4: #{att_forward.1} parent=1 // loop_header_branch
      %20 = sbr.rel (%p18) target = $region8
    $region5: #{att_forward.1} parent=1 // loop_body
      %s22 = ssub.s32 %s17, 1
      %s23 = ssub.s32 %s17, 2
      %s30 = sadd.s32 1, %s25
      %p31 = scmp.ge.s32.totalorder %s30, 2
      %s32 = scalar_select %p31, 0, %s30
      %s33 = sadd.s32 1, %s24
      %s34 = scalar_select %p31, %s33, %s24
      %p35 = scmp.ge.s32.totalorder %s34, 2
      %s36 = scalar_select %p35, 0, %s34
      %s37 = ssub.s32 %s24, %s36
      %p38 = scmp.eq.s32.totalorder %s37, 0
      %s40 = sadd.s32 %s39, 1
      %s41 = scalar_select %p38, %s39, %s40
      %p44 = pneg %p38
      %p45 = scmp.eq.s32.totalorder %s17, 3
      %p46 = por %p44, %p45
      %p47 = scmp.ne.s32.totalorder %s39, %s42
      %p48 = scmp.eq.s32.totalorder %s17, 0
      %p49 = por %p47, %p48
      %p50 = scmp.ne.s32.totalorder %s39, %s42
      %p51 = scmp.eq.s32.totalorder %s22, 3
      %p52 = por %p50, %p51
      %p53 = scmp.ne.s32.totalorder %s42, %s43
      %p54 = scmp.eq.s32.totalorder %s22, 0
      %p55 = por %p53, %p54
      %p56 = scmp.ne.s32.totalorder %s42, %s43
      %p57 = scmp.eq.s32.totalorder %s23, 3
      %p58 = por %p56, %p57
      %p60 = scmp.ne.s32.totalorder %s43, %s59
      %p61 = scmp.eq.s32.totalorder %s23, 0
      %p62 = por %p60, %p61
      %s64 = sadd.s32 %s63, 1
      %p67 = scmp.eq.s32.totalorder %s17, 3
      %p68 = scmp.ne.s32.totalorder %s63, %s65
      %p69 = scmp.eq.s32.totalorder %s17, 0
      %p70 = por %p68, %p69
      %p71 = scmp.ne.s32.totalorder %s63, %s65
      %p72 = scmp.eq.s32.totalorder %s22, 3
      %p73 = por %p71, %p72
      %p74 = scmp.ne.s32.totalorder %s65, %s66
      %p75 = scmp.eq.s32.totalorder %s22, 0
      %p76 = por %p74, %p75
      %p77 = scmp.ne.s32.totalorder %s65, %s66
      %p78 = scmp.eq.s32.totalorder %s23, 3
      %p79 = por %p77, %p78
      %p81 = scmp.ne.s32.totalorder %s66, %s80
      %p82 = scmp.eq.s32.totalorder %s23, 0
      %p83 = por %p81, %p82
      %s85 = sadd.s32 %s84, 1
      %p88 = scmp.eq.s32.totalorder %s17, 3
      %p89 = scmp.ne.s32.totalorder %s84, %s86
      %p90 = scmp.eq.s32.totalorder %s17, 0
      %p91 = por %p89, %p90
      %p92 = scmp.ne.s32.totalorder %s84, %s86
      %p93 = scmp.eq.s32.totalorder %s22, 3
      %p94 = por %p92, %p93
      %p95 = scmp.ne.s32.totalorder %s86, %s87
      %p96 = scmp.eq.s32.totalorder %s22, 0
      %p97 = por %p95, %p96
      %p98 = scmp.ne.s32.totalorder %s86, %s87
      %p99 = scmp.eq.s32.totalorder %s23, 3
      %p100 = por %p98, %p99
      %p102 = scmp.ne.s32.totalorder %s87, %s101
      %p103 = scmp.eq.s32.totalorder %s23, 0
      %p104 = por %p102, %p103
      %s106 = sadd.s32 %s105, 1
      %p109 = scmp.eq.s32.totalorder %s17, 3
      %p110 = scmp.ne.s32.totalorder %s105, %s107
      %p111 = scmp.eq.s32.totalorder %s17, 0
      %p112 = por %p110, %p111
      %p113 = scmp.ne.s32.totalorder %s105, %s107
      %p114 = scmp.eq.s32.totalorder %s22, 3
      %p115 = por %p113, %p114
      %p116 = scmp.ne.s32.totalorder %s107, %s108
      %p117 = scmp.eq.s32.totalorder %s22, 0
      %p118 = por %p116, %p117
      %p119 = scmp.ne.s32.totalorder %s107, %s108
      %p120 = scmp.eq.s32.totalorder %s23, 3
      %p121 = por %p119, %p120
      %p123 = scmp.ne.s32.totalorder %s108, %s122
      %p124 = scmp.eq.s32.totalorder %s23, 0
      %p125 = por %p123, %p124
      %s127 = sadd.s32 %s126, 1
      %p130 = scmp.eq.s32.totalorder %s17, 3
      %p131 = scmp.ne.s32.totalorder %s126, %s128
      %p132 = scmp.eq.s32.totalorder %s17, 0
      %p133 = por %p131, %p132
      %p134 = scmp.ne.s32.totalorder %s126, %s128
      %p135 = scmp.eq.s32.totalorder %s22, 3
      %p136 = por %p134, %p135
      %p137 = scmp.ne.s32.totalorder %s128, %s129
      %p138 = scmp.eq.s32.totalorder %s22, 0
      %p139 = por %p137, %p138
      %p140 = scmp.ne.s32.totalorder %s128, %s129
      %p141 = scmp.eq.s32.totalorder %s23, 3
      %p142 = por %p140, %p141
      %p144 = scmp.ne.s32.totalorder %s129, %s143
      %p145 = scmp.eq.s32.totalorder %s23, 0
      %p146 = por %p144, %p145
      %s148 = sadd.s32 %s147, 1
      %p151 = scmp.eq.s32.totalorder %s17, 3
      %p152 = scmp.ne.s32.totalorder %s147, %s149
      %p153 = scmp.eq.s32.totalorder %s17, 0
      %p154 = por %p152, %p153
      %p155 = scmp.ne.s32.totalorder %s147, %s149
      %p156 = scmp.eq.s32.totalorder %s22, 3
      %p157 = por %p155, %p156
      %p158 = scmp.ne.s32.totalorder %s149, %s150
      %p159 = scmp.eq.s32.totalorder %s22, 0
      %p160 = por %p158, %p159
      %p161 = scmp.ne.s32.totalorder %s149, %s150
      %p162 = scmp.eq.s32.totalorder %s23, 3
      %p163 = por %p161, %p162
      %p165 = scmp.ne.s32.totalorder %s150, %s164
      %p166 = scmp.eq.s32.totalorder %s23, 0
      %p167 = por %p165, %p166
      %s169 = sadd.s32 %s168, 1
      %p172 = scmp.eq.s32.totalorder %s17, 3
      %p173 = scmp.ne.s32.totalorder %s168, %s170
      %p174 = scmp.eq.s32.totalorder %s17, 0
      %p175 = por %p173, %p174
      %p176 = scmp.ne.s32.totalorder %s168, %s170
      %p177 = scmp.eq.s32.totalorder %s22, 3
      %p178 = por %p176, %p177
      %p179 = scmp.ne.s32.totalorder %s170, %s171
      %p180 = scmp.eq.s32.totalorder %s22, 0
      %p181 = por %p179, %p180
      %p182 = scmp.ne.s32.totalorder %s170, %s171
      %p183 = scmp.eq.s32.totalorder %s23, 3
      %p184 = por %p182, %p183
      %p186 = scmp.ne.s32.totalorder %s171, %s185
      %p187 = scmp.eq.s32.totalorder %s23, 0
      %p188 = por %p186, %p187
      %s190 = sadd.s32 %s189, 1
      %p193 = scmp.eq.s32.totalorder %s17, 3
      %p194 = scmp.ne.s32.totalorder %s189, %s191
      %p195 = scmp.eq.s32.totalorder %s17, 0
      %p196 = por %p194, %p195
      %p197 = scmp.ne.s32.totalorder %s189, %s191
      %p198 = scmp.eq.s32.totalorder %s22, 3
      %p199 = por %p197, %p198
      %p200 = scmp.ne.s32.totalorder %s191, %s192
      %p201 = scmp.eq.s32.totalorder %s22, 0
      %p202 = por %p200, %p201
      %p203 = scmp.ne.s32.totalorder %s191, %s192
      %p204 = scmp.eq.s32.totalorder %s23, 3
      %p205 = por %p203, %p204
      %p207 = scmp.ne.s32.totalorder %s192, %s206
      %p208 = scmp.eq.s32.totalorder %s23, 0
      %p209 = por %p207, %p208
      %s211 = sadd.s32 %s210, 1
      %p214 = scmp.eq.s32.totalorder %s17, 3
      %p215 = scmp.ne.s32.totalorder %s210, %s212
      %p216 = scmp.eq.s32.totalorder %s17, 0
      %p217 = por %p215, %p216
      %p218 = scmp.ne.s32.totalorder %s210, %s212
      %p219 = scmp.eq.s32.totalorder %s22, 3
      %p220 = por %p218, %p219
      %p221 = scmp.ne.s32.totalorder %s212, %s213
      %p222 = scmp.eq.s32.totalorder %s22, 0
      %p223 = por %p221, %p222
      %p224 = scmp.ne.s32.totalorder %s212, %s213
      %p225 = scmp.eq.s32.totalorder %s23, 3
      %p226 = por %p224, %p225
      %p228 = scmp.ne.s32.totalorder %s213, %s227
      %p229 = scmp.eq.s32.totalorder %s23, 0
      %p230 = por %p228, %p229
      %s231 = ssub.s32 %s24, %s36
      %s232 = ssub.s32 %s25, %s32
      %s233 = sor.u32 %s231, %s232
      %p234 = scmp.eq.s32.totalorder %s233, 0
      %s236 = sadd.s32 %s235, 1
      %s237 = scalar_select %p234, %s235, %s236
      %p240 = pneg %p234
      %p241 = scmp.eq.s32.totalorder %s17, 3
      %p242 = por %p240, %p241
      %p243 = scmp.ne.s32.totalorder %s235, %s238
      %p244 = scmp.eq.s32.totalorder %s17, 0
      %p245 = por %p243, %p244
      %p246 = scmp.ne.s32.totalorder %s235, %s238
      %p247 = scmp.eq.s32.totalorder %s22, 3
      %p248 = por %p246, %p247
      %p249 = scmp.ne.s32.totalorder %s238, %s239
      %p250 = scmp.eq.s32.totalorder %s22, 0
      %p251 = por %p249, %p250
      %p252 = scmp.ne.s32.totalorder %s238, %s239
      %p253 = scmp.eq.s32.totalorder %s23, 3
      %p254 = por %p252, %p253
      %p256 = scmp.ne.s32.totalorder %s239, %s255
      %p257 = scmp.eq.s32.totalorder %s23, 0
      %p258 = por %p256, %p257
      %p259 = scmp.le.s32.totalorder 1, %s17
      %p260 = scmp.lt.s32.totalorder %s17, 5
      %p261 = pnand %p259, %p260
      %p262 = pneg %p261
      // Predicated region
      $region9: #{att_forward.1} parent=5 // pred_check
        _
      $region10: #{att_forward.1} parent=5 // pred_check_branch
        %264 = sbr.rel (%p261) target = $region12
      $region11: #{att_forward.1} parent=5 // pred_region
        %s265 = ssub.s32 %s17, 1
        // Predicated region
        $region13: #{att_forward.1} parent=11 // pred_check
          %p266 = pneg %p76
        $region14: #{att_forward.1} parent=11 // pred_check_branch
          %268 = sbr.rel (%p266) target = $region16
        $region15: #{att_forward.1} parent=11 // pred_region
          _
        $region16: #{att_forward.1} parent=11 // pred_fallthru
          _
        // Predicated region
        $region17: #{att_forward.1} parent=11 // pred_check
          %p269 = pneg %p97
        $region18: #{att_forward.1} parent=11 // pred_check_branch
          %271 = sbr.rel (%p269) target = $region20
        $region19: #{att_forward.1} parent=11 // pred_region
          _
        $region20: #{att_forward.1} parent=11 // pred_fallthru
          _
        // Predicated region
        $region21: #{att_forward.1} parent=11 // pred_check
          %p272 = pneg %p118
        $region22: #{att_forward.1} parent=11 // pred_check_branch
          %274 = sbr.rel (%p272) target = $region24
        $region23: #{att_forward.1} parent=11 // pred_region
          _
        $region24: #{att_forward.1} parent=11 // pred_fallthru
          _
        // Predicated region
        $region25: #{att_forward.1} parent=11 // pred_check
          %p275 = pneg %p139
        $region26: #{att_forward.1} parent=11 // pred_check_branch
          %277 = sbr.rel (%p275) target = $region28
        $region27: #{att_forward.1} parent=11 // pred_region
          _
        $region28: #{att_forward.1} parent=11 // pred_fallthru
          _
        // Predicated region
        $region29: #{att_forward.1} parent=11 // pred_check
          %p278 = pneg %p160
        $region30: #{att_forward.1} parent=11 // pred_check_branch
          %280 = sbr.rel (%p278) target = $region32
        $region31: #{att_forward.1} parent=11 // pred_region
          _
        $region32: #{att_forward.1} parent=11 // pred_fallthru
          _
        // Predicated region
        $region33: #{att_forward.1} parent=11 // pred_check
          %p281 = pneg %p181
        $region34: #{att_forward.1} parent=11 // pred_check_branch
          %283 = sbr.rel (%p281) target = $region36
        $region35: #{att_forward.1} parent=11 // pred_region
          _
        $region36: #{att_forward.1} parent=11 // pred_fallthru
          _
        // Predicated region
        $region37: #{att_forward.1} parent=11 // pred_check
          %p284 = pneg %p202
        $region38: #{att_forward.1} parent=11 // pred_check_branch
          %286 = sbr.rel (%p284) target = $region40
        $region39: #{att_forward.1} parent=11 // pred_region
          _
        $region40: #{att_forward.1} parent=11 // pred_fallthru
          _
        // Predicated region
        $region41: #{att_forward.1} parent=11 // pred_check
          %p287 = pneg %p223
        $region42: #{att_forward.1} parent=11 // pred_check_branch
          %289 = sbr.rel (%p287) target = $region44
        $region43: #{att_forward.1} parent=11 // pred_region
          _
        $region44: #{att_forward.1} parent=11 // pred_fallthru
          _
      $region12: #{att_forward.1} parent=5 // pred_fallthru
        _
      %p290 = scmp.lt.s32.totalorder %s17, 4
      // Predicated region
      $region45: #{att_forward.1} parent=5 // pred_check
        %p291 = pneg %p290
      $region46: #{att_forward.1} parent=5 // pred_check_branch
        %293 = sbr.rel (%p291) target = $region48
      $region47: #{att_forward.1} parent=5 // pred_region
        // Predicated region
        $region49: #{att_forward.1} parent=47 // pred_check
          %p294 = pneg %p49
        $region50: #{att_forward.1} parent=47 // pred_check_branch
          %296 = sbr.rel (%p294) target = $region52
        $region51: #{att_forward.1} parent=47 // pred_region
          %p297 = scmp.lt.s32.totalorder %s24, 1
          %s298 = scalar_select %p297, %s24, 1
          %s299 = smul.addr %s298, 16
          %s300 = smul.addr %s299, 8
          %s301 = scalar_lea.vmem %s0, %s300
        $region52: #{att_forward.1} parent=47 // pred_fallthru
          _
      $region48: #{att_forward.1} parent=5 // pred_fallthru
        _
      %p302 = scmp.le.s32.totalorder 1, %s17
      %p303 = scmp.lt.s32.totalorder %s17, 5
      %p304 = pnand %p302, %p303
      %p305 = pneg %p304
      // Predicated region
      $region53: #{att_forward.1} parent=5 // pred_check
        _
      $region54: #{att_forward.1} parent=5 // pred_check_branch
        %307 = sbr.rel (%p304) target = $region56
      $region55: #{att_forward.1} parent=5 // pred_region
        %s308 = ssub.s32 %s17, 1
        %p309 = scmp.lt.s32.totalorder %s26, 1
        %s310 = scalar_select %p309, %s26, 1
        %s311 = smul.addr %s310, 16
        %s312 = smul.addr %s311, 8
        %s313 = scalar_lea.vmem %s0, %s312
        %p314 = pneg %p55
        %p315 = pneg %p52
        %p316 = pneg %p76
        %p317 = pneg %p73
        %p318 = pneg %p97
        %p319 = pneg %p94
        %p320 = pneg %p118
        %p321 = pneg %p115
        %p322 = pneg %p139
        %p323 = pneg %p136
        %p324 = pneg %p160
        %p325 = pneg %p157
        %p326 = pneg %p181
        %p327 = pneg %p178
        %p328 = pneg %p202
        %p329 = pneg %p199
        %p330 = pneg %p223
        %p331 = pneg %p220
        %p332 = pneg %p251
        %p333 = pneg %p248
        %s334 = sand.u32 %s238, 1
        %s335 = sand.u32 %s238, 1
        %s336 = smul.addr %s335, 64
        %s337 = scalar_lea.vmem [#allocation8], %s336
        %p338 = scmp.lt.s32.totalorder %s26, 1
        %s339 = scalar_select %p338, %s26, 1
        %s340 = smul.addr %s339, 16
        %s341 = smul.addr %s340, 8
        %s342 = scalar_lea.vmem %s0, %s341
        %p343 = scmp.eq.s32.totalorder %s27, 0
        // Predicated region
        $region57: #{att_forward.1} parent=55 // pred_check
          %p344 = pneg %p343
        $region58: #{att_forward.1} parent=55 // pred_check_branch
          %346 = sbr.rel (%p344) target = $region60
        $region59: #{att_forward.1} parent=55 // pred_region
          %v347 = vld [vmem:[%s342] sm:$0xff]
          %v348 = vld [vmem:[%s342 + $0x8] sm:$0xff]
          %v349 = vld [vmem:[%s342 + $0x10] sm:$0xff]
          %v350 = vld [vmem:[%s342 + $0x18] sm:$0xff]
          %v351 = vld [vmem:[%s342 + $0x20] sm:$0xff]
          %v352 = vld [vmem:[%s342 + $0x28] sm:$0xff]
          %v353 = vld [vmem:[%s342 + $0x30] sm:$0xff]
          %v354 = vld [vmem:[%s342 + $0x38] sm:$0xff]
          %v355 = vld [vmem:[%s342 + $0x40] sm:$0xff]
          %v356 = vld [vmem:[%s342 + $0x48] sm:$0xff]
          %v357 = vld [vmem:[%s342 + $0x50] sm:$0xff]
          %v358 = vld [vmem:[%s342 + $0x58] sm:$0xff]
          %v359 = vld [vmem:[%s342 + $0x60] sm:$0xff]
          %v360 = vld [vmem:[%s342 + $0x68] sm:$0xff]
          %v361 = vld [vmem:[%s342 + $0x70] sm:$0xff]
          %v362 = vld [vmem:[%s342 + $0x78] sm:$0xff]
          %v363 = vld [vmem:[%s3] sm:$0xff]
          %v364 = vld [vmem:[%s4] sm:$0xff]
          %366 = vset.pattern.permute.xlu0 0
          %367 = vperm.xlu0 %366, %v364
          %v368 = vpop.permute.xlu0 %367
          %vm370 = vcmask 523264
          %v372 = vsel %vm370, %v363, 0
          %374 = vmatprep.subr.mxu0 0.0
          %375 = vmatpush1.msra.mxu0 0.0
          %376 = vmatprep.subr.mxu0 0.0
          %377 = vmatpush1.msra.mxu0 0.0
          %378 = vmatprep.subr.mxu0 0.0
          %379 = vmatpush1.msra.mxu0 0.0
          %380 = vmatprep.subr.mxu0 0.0
          %381 = vmatpush1.msra.mxu0 0.0
          %382 = vmatprep.subr.mxu0 0.0
          %383 = vmatpush1.msra.mxu0 0.0
          %384 = vmatprep.subr.mxu0 0.0
          %385 = vmatpush1.msra.mxu0 0.0
          %386 = vmatprep.subr.mxu0 0.0
          %387 = vmatpush1.msra.mxu0 0.0
          %388 = vmatprep.subr.mxu0 0.0
          %389 = vmatpush1.msra.mxu0 0.0
          %390 = vmatprep.subr.mxu0 %v362
          %391 = vmatpush1.msra.mxu0 %v361
          %392 = vmatprep.subr.mxu0 %v360
          %393 = vmatpush1.msra.mxu0 %v359
          %394 = vmatprep.subr.mxu0 %v358
          %395 = vmatpush1.msra.mxu0 %v357
          %396 = vmatprep.subr.mxu0 %v356
          %397 = vmatpush1.msra.mxu0 %v355
          %398 = vmatprep.subr.mxu0 %v354
          %399 = vmatpush1.msra.mxu0 %v353
          %400 = vmatprep.subr.mxu0 %v352
          %401 = vmatpush1.msra.mxu0 %v351
          %402 = vmatprep.subr.mxu0 %v350
          %403 = vmatpush1.msra.mxu0 %v349
          %404 = vmatprep.subr.mxu0 %v348
          %405 = vmatpush1.msra.mxu0 %v347
          %406 = vmatprep.subr.mxu0 0.0
          %407 = vmatpush2.msra.mxu0 0.0
          %408 = vmatprep.subr.mxu0 0.0
          %409 = vmatpush2.msra.mxu0 0.0
          %410 = vmatprep.subr.mxu0 0.0
          %411 = vmatpush2.msra.mxu0 0.0
          %412 = vmatprep.subr.mxu0 0.0
          %413 = vmatpush2.msra.mxu0 0.0
          %414 = vmatprep.subr.mxu0 0.0
          %415 = vmatpush2.msra.mxu0 0.0
          %416 = vmatprep.subr.mxu0 0.0
          %417 = vmatpush2.msra.mxu0 0.0
          %418 = vmatprep.subr.mxu0 0.0
          %419 = vmatpush2.msra.mxu0 0.0
          %420 = vmatprep.subr.mxu0 0.0
          %421 = vmatpush2.msra.mxu0 0.0
          %422 = vmatprep.subr.mxu0 0.0
          %423 = vmatpush2.msra.mxu0 0.0
          %424 = vmatprep.subr.mxu0 0.0
          %425 = vmatpush2.msra.mxu0 0.0
          %426 = vmatprep.subr.mxu0 0.0
          %427 = vmatpush2.msra.mxu0 0.0
          %428 = vmatprep.subr.mxu0 0.0
          %429 = vmatpush2.msra.mxu0 0.0
          %430 = vmatprep.subr.mxu0 0.0
          %431 = vmatpush2.msra.mxu0 0.0
          %432 = vmatprep.subr.mxu0 0.0
          %433 = vmatpush2.msra.mxu0 0.0
          %434 = vmatprep.subr.mxu0 0.0
          %435 = vmatpush2.msra.mxu0 0.0
          %436 = vmatprep.subr.mxu0 0.0
          %437 = vmatpush2.msra.mxu0 0.0
          %438 = vmatprep.mubr.f32.mxu0 0.0
          %439 = vmatmul.mubr.f32.gmra.mxu0 %v372
          %v440 = vpop.f32.mrf.mxu0
          %v441 = vadd.f32 %v368, %v440
          %v442 = vpop.f32.mrf.mxu0
          %v443 = vadd.f32 %v368, %v442
          %444 = vdwg.mxu0
          %v445 = vld [vmem:[%s1] sm:$0xff]
          %v446 = vld [vmem:[%s1 + $0x8] sm:$0xff]
          %v447 = vld [vmem:[%s1 + $0x10] sm:$0xff]
          %v448 = vld [vmem:[%s1 + $0x18] sm:$0xff]
          %v449 = vld [vmem:[%s1 + $0x20] sm:$0xff]
          %v450 = vld [vmem:[%s1 + $0x28] sm:$0xff]
          %v451 = vld [vmem:[%s1 + $0x30] sm:$0xff]
          %v452 = vld [vmem:[%s1 + $0x38] sm:$0xff]
          %vm453 = vcmask 64512
          %v455 = vsel %vm453, %v445, 0
          %v458 = vsel %vm453, %v446, 0
          %v461 = vsel %vm453, %v447, 0
          %v464 = vsel %vm453, %v448, 0
          %v467 = vsel %vm453, %v449, 0
          %v470 = vsel %vm453, %v450, 0
          %v473 = vsel %vm453, %v451, 0
          %v476 = vsel %vm453, %v452, 0
          %478 = vmatprep.subr.mxu0 0.0
          %479 = vmatpush1.msra.mxu0 0.0
          %480 = vmatprep.subr.mxu0 0.0
          %481 = vmatpush1.msra.mxu0 0.0
          %482 = vmatprep.subr.mxu0 0.0
          %483 = vmatpush1.msra.mxu0 0.0
          %484 = vmatprep.subr.mxu0 0.0
          %485 = vmatpush1.msra.mxu0 0.0
          %486 = vmatprep.subr.mxu0 0.0
          %487 = vmatpush1.msra.mxu0 0.0
          %488 = vmatprep.subr.mxu0 0.0
          %489 = vmatpush1.msra.mxu0 0.0
          %490 = vmatprep.subr.mxu0 0.0
          %491 = vmatpush1.msra.mxu0 0.0
          %492 = vmatprep.subr.mxu0 0.0
          %493 = vmatpush1.msra.mxu0 0.0
          %494 = vmatprep.subr.mxu0 0.0
          %495 = vmatpush1.msra.mxu0 0.0
          %496 = vmatprep.subr.mxu0 0.0
          %497 = vmatpush1.msra.mxu0 0.0
          %498 = vmatprep.subr.mxu0 0.0
          %499 = vmatpush1.msra.mxu0 0.0
          %500 = vmatprep.subr.mxu0 0.0
          %501 = vmatpush1.msra.mxu0 0.0
          %502 = vmatprep.subr.mxu0 0.0
          %503 = vmatpush1.msra.mxu0 0.0
          %504 = vmatprep.subr.mxu0 0.0
          %505 = vmatpush1.msra.mxu0 0.0
          %506 = vmatprep.subr.mxu0 0.0
          %507 = vmatpush1.msra.mxu0 0.0
          %508 = vmatprep.subr.mxu0 %v443
          %509 = vmatpush1.msra.mxu0 %v441
          %510 = vmatprep.subr.mxu0 0.0
          %511 = vmatpush2.msra.mxu0 0.0
          %512 = vmatprep.subr.mxu0 0.0
          %513 = vmatpush2.msra.mxu0 0.0
          %514 = vmatprep.subr.mxu0 0.0
          %515 = vmatpush2.msra.mxu0 0.0
          %516 = vmatprep.subr.mxu0 0.0
          %517 = vmatpush2.msra.mxu0 0.0
          %518 = vmatprep.subr.mxu0 0.0
          %519 = vmatpush2.msra.mxu0 0.0
          %520 = vmatprep.subr.mxu0 0.0
          %521 = vmatpush2.msra.mxu0 0.0
          %522 = vmatprep.subr.mxu0 0.0
          %523 = vmatpush2.msra.mxu0 0.0
          %524 = vmatprep.subr.mxu0 0.0
          %525 = vmatpush2.msra.mxu0 0.0
          %526 = vmatprep.subr.mxu0 0.0
          %527 = vmatpush2.msra.mxu0 0.0
          %528 = vmatprep.subr.mxu0 0.0
          %529 = vmatpush2.msra.mxu0 0.0
          %530 = vmatprep.subr.mxu0 0.0
          %531 = vmatpush2.msra.mxu0 0.0
          %532 = vmatprep.subr.mxu0 0.0
          %533 = vmatpush2.msra.mxu0 0.0
          %534 = vmatprep.subr.mxu0 0.0
          %535 = vmatpush2.msra.mxu0 0.0
          %536 = vmatprep.subr.mxu0 0.0
          %537 = vmatpush2.msra.mxu0 0.0
          %538 = vmatprep.subr.mxu0 0.0
          %539 = vmatpush2.msra.mxu0 0.0
          %540 = vmatprep.subr.mxu0 0.0
          %541 = vmatpush2.msra.mxu0 0.0
          %542 = vmatprep.mubr.f32.mxu0 0.0
          %543 = vmatmul.mubr.f32.gmra.mxu0 %v455
          %v544 = vpop.f32.mrf.mxu0
          %v545 = vadd.f32 0.0, %v544
          %v546 = vpop.f32.mrf.mxu0
          %v547 = vadd.f32 0.0, %v546
          %548 = vmatprep.mubr.f32.mxu0 0.0
          %549 = vmatmul.mubr.f32.gmra.mxu0 %v458
          %v550 = vpop.f32.mrf.mxu0
          %v551 = vadd.f32 0.0, %v550
          %v552 = vpop.f32.mrf.mxu0
          %v553 = vadd.f32 0.0, %v552
          %554 = vmatprep.mubr.f32.mxu0 0.0
          %555 = vmatmul.mubr.f32.gmra.mxu0 %v461
          %v556 = vpop.f32.mrf.mxu0
          %v557 = vadd.f32 0.0, %v556
          %v558 = vpop.f32.mrf.mxu0
          %v559 = vadd.f32 0.0, %v558
          %560 = vmatprep.mubr.f32.mxu0 0.0
          %561 = vmatmul.mubr.f32.gmra.mxu0 %v464
          %v562 = vpop.f32.mrf.mxu0
          %v563 = vadd.f32 0.0, %v562
          %v564 = vpop.f32.mrf.mxu0
          %v565 = vadd.f32 0.0, %v564
          %566 = vmatprep.mubr.f32.mxu0 0.0
          %567 = vmatmul.mubr.f32.gmra.mxu0 %v467
          %v568 = vpop.f32.mrf.mxu0
          %v569 = vadd.f32 0.0, %v568
          %v570 = vpop.f32.mrf.mxu0
          %v571 = vadd.f32 0.0, %v570
          %572 = vmatprep.mubr.f32.mxu0 0.0
          %573 = vmatmul.mubr.f32.gmra.mxu0 %v470
          %v574 = vpop.f32.mrf.mxu0
          %v575 = vadd.f32 0.0, %v574
          %v576 = vpop.f32.mrf.mxu0
          %v577 = vadd.f32 0.0, %v576
          %578 = vmatprep.mubr.f32.mxu0 0.0
          %579 = vmatmul.mubr.f32.gmra.mxu0 %v473
          %v580 = vpop.f32.mrf.mxu0
          %v581 = vadd.f32 0.0, %v580
          %v582 = vpop.f32.mrf.mxu0
          %v583 = vadd.f32 0.0, %v582
          %584 = vmatprep.mubr.f32.mxu0 0.0
          %585 = vmatmul.mubr.f32.gmra.mxu0 %v476
          %v586 = vpop.f32.mrf.mxu0
          %v587 = vadd.f32 0.0, %v586
          %v588 = vpop.f32.mrf.mxu0
          %v589 = vadd.f32 0.0, %v588
          %590 = vdwg.mxu0
          %591 = vst [vmem:[#allocation2] sm:$0xff] %v545
          %592 = vst [vmem:[#allocation2 + $0x8] sm:$0xff] %v547
          %593 = vst [vmem:[#allocation2 + $0x10] sm:$0xff] %v551
          %594 = vst [vmem:[#allocation2 + $0x18] sm:$0xff] %v553
          %595 = vst [vmem:[#allocation2 + $0x20] sm:$0xff] %v557
          %596 = vst [vmem:[#allocation2 + $0x28] sm:$0xff] %v559
          %597 = vst [vmem:[#allocation2 + $0x30] sm:$0xff] %v563
          %598 = vst [vmem:[#allocation2 + $0x38] sm:$0xff] %v565
          %599 = vst [vmem:[#allocation2 + $0x40] sm:$0xff] %v569
          %600 = vst [vmem:[#allocation2 + $0x48] sm:$0xff] %v571
          %601 = vst [vmem:[#allocation2 + $0x50] sm:$0xff] %v575
          %602 = vst [vmem:[#allocation2 + $0x58] sm:$0xff] %v577
          %603 = vst [vmem:[#allocation2 + $0x60] sm:$0xff] %v581
          %604 = vst [vmem:[#allocation2 + $0x68] sm:$0xff] %v583
          %605 = vst [vmem:[#allocation2 + $0x70] sm:$0xff] %v587
          %606 = vst [vmem:[#allocation2 + $0x78] sm:$0xff] %v589
          %v607 = vld [vmem:[%s2] sm:$0xff]
          %609 = vset.pattern.permute.xlu0 0
          %610 = vperm.xlu0 %609, %v607
          %v611 = vpop.permute.xlu0 %610
          %v613 = vmul.f32 %v611, %v441
          %v614 = vmul.f32 %v611, %v443
          %v615 = vrot.slane %v613, 4
          %v616 = vadd.f32 %v613, %v615
          %v617 = vrot.slane %v616, 2
          %v618 = vadd.f32 %v616, %v617
          %v619 = vrot.slane %v618, 1
          %v620 = vadd.f32 %v618, %v619
          %v621 = vrot.slane %v614, 4
          %v622 = vadd.f32 %v614, %v621
          %v623 = vrot.slane %v622, 2
          %v624 = vadd.f32 %v622, %v623
          %v625 = vrot.slane %v624, 1
          %v626 = vadd.f32 %v624, %v625
          %v629 = vcombine.low %v620, %v626
          %v631 = vunpack.c.l.s4 1966171168
          %v632 = vunpack.c.0.s8 %v631
          %v633 = vlaneseq
          %v634 = vshrl.u32 %v633, 7
          %v635 = vsub.s32 %v632, %v634
          %v636 = vrot.slane %v629, %v635
          %v638 = vunpack.c.l.s4 1966171168
          %v639 = vunpack.c.0.s8 %v638
          %v640 = vlaneseq
          %v641 = vshrl.u32 %v640, 7
          %v642 = vsub.s32 %v639, %v641
          %v643 = vrot.slane %v636, %v642
          %v645 = vlaneseq
          %vm646 = vcmp.ge.s32.totalorder %v645, 0
          %vm647 = vcmp.lt.s32.totalorder %v645, 256
          %vm648 = vmand %vm646, %vm647
          %649 = vst.msk [vmem:[#allocation3] sm:$0x3] %vm648, %v643
          %v650 = vld [vmem:[%s5] sm:$0xff]
          %v651 = vld [vmem:[%s5 + $0x8] sm:$0xff]
          %v652 = vld [vmem:[%s5 + $0x10] sm:$0xff]
          %v653 = vld [vmem:[%s5 + $0x18] sm:$0xff]
          %v654 = vld [vmem:[%s5 + $0x20] sm:$0xff]
          %v655 = vld [vmem:[%s5 + $0x28] sm:$0xff]
          %v656 = vld [vmem:[%s5 + $0x30] sm:$0xff]
          %v657 = vld [vmem:[%s5 + $0x38] sm:$0xff]
          %v658 = vld [vmem:[%s6] sm:$0xff]
          %v659 = vld [vmem:[%s6 + $0x8] sm:$0xff]
          %v660 = vld [vmem:[%s6 + $0x10] sm:$0xff]
          %v661 = vld [vmem:[%s6 + $0x18] sm:$0xff]
          %v662 = vld [vmem:[%s6 + $0x20] sm:$0xff]
          %v663 = vld [vmem:[%s6 + $0x28] sm:$0xff]
          %v664 = vld [vmem:[%s6 + $0x30] sm:$0xff]
          %v665 = vld [vmem:[%s6 + $0x38] sm:$0xff]
          %667 = vset.pattern.permute.xlu0 0
          %668 = vperm.xlu0 %667, %v658
          %v669 = vpop.permute.xlu0 %668
          %672 = vset.pattern.permute.xlu0 0
          %673 = vperm.xlu0 %672, %v659
          %v674 = vpop.permute.xlu0 %673
          %677 = vset.pattern.permute.xlu0 0
          %678 = vperm.xlu0 %677, %v660
          %v679 = vpop.permute.xlu0 %678
          %682 = vset.pattern.permute.xlu0 0
          %683 = vperm.xlu0 %682, %v661
          %v684 = vpop.permute.xlu0 %683
          %687 = vset.pattern.permute.xlu0 0
          %688 = vperm.xlu0 %687, %v662
          %v689 = vpop.permute.xlu0 %688
          %692 = vset.pattern.permute.xlu0 0
          %693 = vperm.xlu0 %692, %v663
          %v694 = vpop.permute.xlu0 %693
          %697 = vset.pattern.permute.xlu0 0
          %698 = vperm.xlu0 %697, %v664
          %v699 = vpop.permute.xlu0 %698
          %702 = vset.pattern.permute.xlu0 0
          %703 = vperm.xlu0 %702, %v665
          %v704 = vpop.permute.xlu0 %703
          %v707 = vsel %vm370, %v650, 0
          %v710 = vsel %vm370, %v651, 0
          %v713 = vsel %vm370, %v652, 0
          %v716 = vsel %vm370, %v653, 0
          %v719 = vsel %vm370, %v654, 0
          %v722 = vsel %vm370, %v655, 0
          %v725 = vsel %vm370, %v656, 0
          %v728 = vsel %vm370, %v657, 0
          %730 = vmatprep.subr.mxu0 0.0
          %731 = vmatpush1.msra.mxu0 0.0
          %732 = vmatprep.subr.mxu0 0.0
          %733 = vmatpush1.msra.mxu0 0.0
          %734 = vmatprep.subr.mxu0 0.0
          %735 = vmatpush1.msra.mxu0 0.0
          %736 = vmatprep.subr.mxu0 0.0
          %737 = vmatpush1.msra.mxu0 0.0
          %738 = vmatprep.subr.mxu0 0.0
          %739 = vmatpush1.msra.mxu0 0.0
          %740 = vmatprep.subr.mxu0 0.0
          %741 = vmatpush1.msra.mxu0 0.0
          %742 = vmatprep.subr.mxu0 0.0
          %743 = vmatpush1.msra.mxu0 0.0
          %744 = vmatprep.subr.mxu0 0.0
          %745 = vmatpush1.msra.mxu0 0.0
          %746 = vmatprep.subr.mxu0 %v362
          %747 = vmatpush1.msra.mxu0 %v361
          %748 = vmatprep.subr.mxu0 %v360
          %749 = vmatpush1.msra.mxu0 %v359
          %750 = vmatprep.subr.mxu0 %v358
          %751 = vmatpush1.msra.mxu0 %v357
          %752 = vmatprep.subr.mxu0 %v356
          %753 = vmatpush1.msra.mxu0 %v355
          %754 = vmatprep.subr.mxu0 %v354
          %755 = vmatpush1.msra.mxu0 %v353
          %756 = vmatprep.subr.mxu0 %v352
          %757 = vmatpush1.msra.mxu0 %v351
          %758 = vmatprep.subr.mxu0 %v350
          %759 = vmatpush1.msra.mxu0 %v349
          %760 = vmatprep.subr.mxu0 %v348
          %761 = vmatpush1.msra.mxu0 %v347
          %762 = vmatprep.subr.mxu0 0.0
          %763 = vmatpush2.msra.mxu0 0.0
          %764 = vmatprep.subr.mxu0 0.0
          %765 = vmatpush2.msra.mxu0 0.0
          %766 = vmatprep.subr.mxu0 0.0
          %767 = vmatpush2.msra.mxu0 0.0
          %768 = vmatprep.subr.mxu0 0.0
          %769 = vmatpush2.msra.mxu0 0.0
          %770 = vmatprep.subr.mxu0 0.0
          %771 = vmatpush2.msra.mxu0 0.0
          %772 = vmatprep.subr.mxu0 0.0
          %773 = vmatpush2.msra.mxu0 0.0
          %774 = vmatprep.subr.mxu0 0.0
          %775 = vmatpush2.msra.mxu0 0.0
          %776 = vmatprep.subr.mxu0 0.0
          %777 = vmatpush2.msra.mxu0 0.0
          %778 = vmatprep.subr.mxu0 0.0
          %779 = vmatpush2.msra.mxu0 0.0
          %780 = vmatprep.subr.mxu0 0.0
          %781 = vmatpush2.msra.mxu0 0.0
          %782 = vmatprep.subr.mxu0 0.0
          %783 = vmatpush2.msra.mxu0 0.0
          %784 = vmatprep.subr.mxu0 0.0
          %785 = vmatpush2.msra.mxu0 0.0
          %786 = vmatprep.subr.mxu0 0.0
          %787 = vmatpush2.msra.mxu0 0.0
          %788 = vmatprep.subr.mxu0 0.0
          %789 = vmatpush2.msra.mxu0 0.0
          %790 = vmatprep.subr.mxu0 0.0
          %791 = vmatpush2.msra.mxu0 0.0
          %792 = vmatprep.subr.mxu0 0.0
          %793 = vmatpush2.msra.mxu0 0.0
          %794 = vmatprep.mubr.f32.mxu0 0.0
          %795 = vmatmul.mubr.f32.gmra.mxu0 %v707
          %v796 = vpop.f32.mrf.mxu0
          %v797 = vadd.f32 %v669, %v796
          %v798 = vpop.f32.mrf.mxu0
          %v799 = vadd.f32 %v669, %v798
          %800 = vmatprep.mubr.f32.mxu0 0.0
          %801 = vmatmul.mubr.f32.gmra.mxu0 %v710
          %v802 = vpop.f32.mrf.mxu0
          %v803 = vadd.f32 %v674, %v802
          %v804 = vpop.f32.mrf.mxu0
          %v805 = vadd.f32 %v674, %v804
          %806 = vmatprep.mubr.f32.mxu0 0.0
          %807 = vmatmul.mubr.f32.gmra.mxu0 %v713
          %v808 = vpop.f32.mrf.mxu0
          %v809 = vadd.f32 %v679, %v808
          %v810 = vpop.f32.mrf.mxu0
          %v811 = vadd.f32 %v679, %v810
          %812 = vmatprep.mubr.f32.mxu0 0.0
          %813 = vmatmul.mubr.f32.gmra.mxu0 %v716
          %v814 = vpop.f32.mrf.mxu0
          %v815 = vadd.f32 %v684, %v814
          %v816 = vpop.f32.mrf.mxu0
          %v817 = vadd.f32 %v684, %v816
          %818 = vmatprep.mubr.f32.mxu0 0.0
          %819 = vmatmul.mubr.f32.gmra.mxu0 %v719
          %v820 = vpop.f32.mrf.mxu0
          %v821 = vadd.f32 %v689, %v820
          %v822 = vpop.f32.mrf.mxu0
          %v823 = vadd.f32 %v689, %v822
          %824 = vmatprep.mubr.f32.mxu0 0.0
          %825 = vmatmul.mubr.f32.gmra.mxu0 %v722
          %v826 = vpop.f32.mrf.mxu0
          %v827 = vadd.f32 %v694, %v826
          %v828 = vpop.f32.mrf.mxu0
          %v829 = vadd.f32 %v694, %v828
          %830 = vmatprep.mubr.f32.mxu0 0.0
          %831 = vmatmul.mubr.f32.gmra.mxu0 %v725
          %v832 = vpop.f32.mrf.mxu0
          %v833 = vadd.f32 %v699, %v832
          %v834 = vpop.f32.mrf.mxu0
          %v835 = vadd.f32 %v699, %v834
          %836 = vmatprep.mubr.f32.mxu0 0.0
          %837 = vmatmul.mubr.f32.gmra.mxu0 %v728
          %v838 = vpop.f32.mrf.mxu0
          %v839 = vadd.f32 %v704, %v838
          %v840 = vpop.f32.mrf.mxu0
          %v841 = vadd.f32 %v704, %v840
          %842 = vdwg.mxu0
          %843 = vst [vmem:[#allocation4] sm:$0xff] %v797
          %844 = vst [vmem:[#allocation4 + $0x8] sm:$0xff] %v799
          %845 = vst [vmem:[#allocation4 + $0x10] sm:$0xff] %v803
          %846 = vst [vmem:[#allocation4 + $0x18] sm:$0xff] %v805
          %847 = vst [vmem:[#allocation4 + $0x20] sm:$0xff] %v809
          %848 = vst [vmem:[#allocation4 + $0x28] sm:$0xff] %v811
          %849 = vst [vmem:[#allocation4 + $0x30] sm:$0xff] %v815
          %850 = vst [vmem:[#allocation4 + $0x38] sm:$0xff] %v817
          %851 = vst [vmem:[#allocation4 + $0x40] sm:$0xff] %v821
          %852 = vst [vmem:[#allocation4 + $0x48] sm:$0xff] %v823
          %853 = vst [vmem:[#allocation4 + $0x50] sm:$0xff] %v827
          %854 = vst [vmem:[#allocation4 + $0x58] sm:$0xff] %v829
          %855 = vst [vmem:[#allocation4 + $0x60] sm:$0xff] %v833
          %856 = vst [vmem:[#allocation4 + $0x68] sm:$0xff] %v835
          %857 = vst [vmem:[#allocation4 + $0x70] sm:$0xff] %v839
          %858 = vst [vmem:[#allocation4 + $0x78] sm:$0xff] %v841
          %859 = vmatprep.subr.mxu0 0.0
          %860 = vmatpush1.xpose.msra.mxu0 0.0
          %861 = vmatprep.subr.mxu0 0.0
          %862 = vmatpush1.xpose.msra.mxu0 0.0
          %863 = vmatprep.subr.mxu0 0.0
          %864 = vmatpush1.xpose.msra.mxu0 0.0
          %865 = vmatprep.subr.mxu0 0.0
          %866 = vmatpush1.xpose.msra.mxu0 0.0
          %867 = vmatprep.subr.mxu0 0.0
          %868 = vmatpush1.xpose.msra.mxu0 0.0
          %869 = vmatprep.subr.mxu0 0.0
          %870 = vmatpush1.xpose.msra.mxu0 0.0
          %871 = vmatprep.subr.mxu0 0.0
          %872 = vmatpush1.xpose.msra.mxu0 0.0
          %873 = vmatprep.subr.mxu0 0.0
          %874 = vmatpush1.xpose.msra.mxu0 0.0
          %875 = vmatprep.subr.mxu0 %v362
          %876 = vmatpush1.xpose.msra.mxu0 %v361
          %877 = vmatprep.subr.mxu0 %v360
          %878 = vmatpush1.xpose.msra.mxu0 %v359
          %879 = vmatprep.subr.mxu0 %v358
          %880 = vmatpush1.xpose.msra.mxu0 %v357
          %881 = vmatprep.subr.mxu0 %v356
          %882 = vmatpush1.xpose.msra.mxu0 %v355
          %883 = vmatprep.subr.mxu0 %v354
          %884 = vmatpush1.xpose.msra.mxu0 %v353
          %885 = vmatprep.subr.mxu0 %v352
          %886 = vmatpush1.xpose.msra.mxu0 %v351
          %887 = vmatprep.subr.mxu0 %v350
          %888 = vmatpush1.xpose.msra.mxu0 %v349
          %889 = vmatprep.subr.mxu0 %v348
          %890 = vmatpush1.xpose.msra.mxu0 %v347
          %891 = vmatprep.subr.mxu0 0.0
          %892 = vmatpush2.xpose.msra.mxu0 0.0
          %893 = vmatprep.subr.mxu0 0.0
          %894 = vmatpush2.xpose.msra.mxu0 0.0
          %895 = vmatprep.subr.mxu0 0.0
          %896 = vmatpush2.xpose.msra.mxu0 0.0
          %897 = vmatprep.subr.mxu0 0.0
          %898 = vmatpush2.xpose.msra.mxu0 0.0
          %899 = vmatprep.subr.mxu0 0.0
          %900 = vmatpush2.xpose.msra.mxu0 0.0
          %901 = vmatprep.subr.mxu0 0.0
          %902 = vmatpush2.xpose.msra.mxu0 0.0
          %903 = vmatprep.subr.mxu0 0.0
          %904 = vmatpush2.xpose.msra.mxu0 0.0
          %905 = vmatprep.subr.mxu0 0.0
          %906 = vmatpush2.xpose.msra.mxu0 0.0
          %907 = vmatprep.subr.mxu0 0.0
          %908 = vmatpush2.xpose.msra.mxu0 0.0
          %909 = vmatprep.subr.mxu0 0.0
          %910 = vmatpush2.xpose.msra.mxu0 0.0
          %911 = vmatprep.subr.mxu0 0.0
          %912 = vmatpush2.xpose.msra.mxu0 0.0
          %913 = vmatprep.subr.mxu0 0.0
          %914 = vmatpush2.xpose.msra.mxu0 0.0
          %915 = vmatprep.subr.mxu0 0.0
          %916 = vmatpush2.xpose.msra.mxu0 0.0
          %917 = vmatprep.subr.mxu0 0.0
          %918 = vmatpush2.xpose.msra.mxu0 0.0
          %919 = vmatprep.subr.mxu0 0.0
          %920 = vmatpush2.xpose.msra.mxu0 0.0
          %921 = vmatprep.subr.mxu0 0.0
          %922 = vmatpush2.xpose.msra.mxu0 0.0
          %923 = vmatprep.mubr.f32.mxu0 %v348
          %924 = vmatmul.mubr.f32.gmra.mxu0 %v347
          %v925 = vpop.f32.mrf.mxu0
          %v926 = vadd.f32 0.0, %v925
          %v927 = vpop.f32.mrf.mxu0
          %928 = vmatprep.mubr.f32.mxu0 %v350
          %929 = vmatmul.mubr.f32.gmra.mxu0 %v349
          %v930 = vpop.f32.mrf.mxu0
          %v931 = vadd.f32 0.0, %v930
          %v932 = vpop.f32.mrf.mxu0
          %933 = vmatprep.mubr.f32.mxu0 %v352
          %934 = vmatmul.mubr.f32.gmra.mxu0 %v351
          %v935 = vpop.f32.mrf.mxu0
          %v936 = vadd.f32 0.0, %v935
          %v937 = vpop.f32.mrf.mxu0
          %938 = vmatprep.mubr.f32.mxu0 %v354
          %939 = vmatmul.mubr.f32.gmra.mxu0 %v353
          %v940 = vpop.f32.mrf.mxu0
          %v941 = vadd.f32 0.0, %v940
          %v942 = vpop.f32.mrf.mxu0
          %943 = vmatprep.mubr.f32.mxu0 %v356
          %944 = vmatmul.mubr.f32.gmra.mxu0 %v355
          %v945 = vpop.f32.mrf.mxu0
          %v946 = vadd.f32 0.0, %v945
          %v947 = vpop.f32.mrf.mxu0
          %948 = vmatprep.mubr.f32.mxu0 %v358
          %949 = vmatmul.mubr.f32.gmra.mxu0 %v357
          %v950 = vpop.f32.mrf.mxu0
          %v951 = vadd.f32 0.0, %v950
          %v952 = vpop.f32.mrf.mxu0
          %953 = vmatprep.mubr.f32.mxu0 %v360
          %954 = vmatmul.mubr.f32.gmra.mxu0 %v359
          %v955 = vpop.f32.mrf.mxu0
          %v956 = vadd.f32 0.0, %v955
          %v957 = vpop.f32.mrf.mxu0
          %958 = vmatprep.mubr.f32.mxu0 %v362
          %959 = vmatmul.mubr.f32.gmra.mxu0 %v361
          %v960 = vpop.f32.mrf.mxu0
          %v961 = vadd.f32 0.0, %v960
          %v962 = vpop.f32.mrf.mxu0
          %963 = vdwg.mxu0
          %v964 = vsel %vm370, %v926, inf
          %965 = vmin.xlane.f32.xlu0 %v964
          %v966 = vpop.xlane.xlu0 %965
          %v967 = vsel %vm370, %v931, inf
          %968 = vmin.xlane.f32.xlu0 %v967
          %v969 = vpop.xlane.xlu0 %968
          %v970 = vsel %vm370, %v936, inf
          %971 = vmin.xlane.f32.xlu0 %v970
          %v972 = vpop.xlane.xlu0 %971
          %v973 = vsel %vm370, %v941, inf
          %974 = vmin.xlane.f32.xlu0 %v973
          %v975 = vpop.xlane.xlu0 %974
          %v976 = vsel %vm370, %v946, inf
          %977 = vmin.xlane.f32.xlu0 %v976
          %v978 = vpop.xlane.xlu0 %977
          %v979 = vsel %vm370, %v951, inf
          %980 = vmin.xlane.f32.xlu0 %v979
          %v981 = vpop.xlane.xlu0 %980
          %v982 = vsel %vm370, %v956, inf
          %983 = vmin.xlane.f32.xlu0 %v982
          %v984 = vpop.xlane.xlu0 %983
          %v985 = vsel %vm370, %v961, inf
          %986 = vmin.xlane.f32.xlu0 %v985
          %v987 = vpop.xlane.xlu0 %986
          %v988 = vsub.f32 %v966, %v926
          %v989 = vsub.f32 %v969, %v931
          %v990 = vsub.f32 %v972, %v936
          %v991 = vsub.f32 %v975, %v941
          %v992 = vsub.f32 %v978, %v946
          %v993 = vsub.f32 %v981, %v951
          %v994 = vsub.f32 %v984, %v956
          %v995 = vsub.f32 %v987, %v961
          %v996 = vmul.f32 %v988, 1.442695
          %v997 = vpow.pop %v996
          %v998 = vmul.f32 %v989, 1.442695
          %v999 = vpow.pop %v998
          %v1000 = vmul.f32 %v990, 1.442695
          %v1001 = vpow.pop %v1000
          %v1002 = vmul.f32 %v991, 1.442695
          %v1003 = vpow.pop %v1002
          %v1004 = vmul.f32 %v992, 1.442695
          %v1005 = vpow.pop %v1004
          %v1006 = vmul.f32 %v993, 1.442695
          %v1007 = vpow.pop %v1006
          %v1008 = vmul.f32 %v994, 1.442695
          %v1009 = vpow.pop %v1008
          %v1010 = vmul.f32 %v995, 1.442695
          %v1011 = vpow.pop %v1010
          %v1012 = vsel %vm370, %v997, 0.0
          %1013 = vadd.xlane.f32.xlu0 %v1012
          %v1014 = vpop.xlane.xlu0 %1013
          %v1015 = vsel %vm370, %v999, 0.0
          %1016 = vadd.xlane.f32.xlu0 %v1015
          %v1017 = vpop.xlane.xlu0 %1016
          %v1018 = vsel %vm370, %v1001, 0.0
          %1019 = vadd.xlane.f32.xlu0 %v1018
          %v1020 = vpop.xlane.xlu0 %1019
          %v1021 = vsel %vm370, %v1003, 0.0
          %1022 = vadd.xlane.f32.xlu0 %v1021
          %v1023 = vpop.xlane.xlu0 %1022
          %v1024 = vsel %vm370, %v1005, 0.0
          %1025 = vadd.xlane.f32.xlu0 %v1024
          %v1026 = vpop.xlane.xlu0 %1025
          %v1027 = vsel %vm370, %v1007, 0.0
          %1028 = vadd.xlane.f32.xlu0 %v1027
          %v1029 = vpop.xlane.xlu0 %1028
          %v1030 = vsel %vm370, %v1009, 0.0
          %1031 = vadd.xlane.f32.xlu0 %v1030
          %v1032 = vpop.xlane.xlu0 %1031
          %v1033 = vsel %vm370, %v1011, 0.0
          %1034 = vadd.xlane.f32.xlu0 %v1033
          %v1035 = vpop.xlane.xlu0 %1034
          %v1036 = vrcp.pop %v1014
          %v1037 = vrcp.pop %v1017
          %v1038 = vrcp.pop %v1020
          %v1039 = vrcp.pop %v1023
          %v1040 = vrcp.pop %v1026
          %v1041 = vrcp.pop %v1029
          %v1042 = vrcp.pop %v1032
          %v1043 = vrcp.pop %v1035
          %v1044 = vmul.f32 %v997, %v1036
          %v1045 = vmul.f32 %v999, %v1037
          %v1046 = vmul.f32 %v1001, %v1038
          %v1047 = vmul.f32 %v1003, %v1039
          %v1048 = vmul.f32 %v1005, %v1040
          %v1049 = vmul.f32 %v1007, %v1041
          %v1050 = vmul.f32 %v1009, %v1042
          %v1051 = vmul.f32 %v1011, %v1043
          %1052 = vst.msk [vmem:[#allocation5] sm:$0xff] %vm370, %v1044
          %1053 = vst.msk [vmem:[#allocation5 + $0x8] sm:$0xff] %vm370, %v1045
          %1054 = vst.msk [vmem:[#allocation5 + $0x10] sm:$0xff] %vm370, %v1046
          %1055 = vst.msk [vmem:[#allocation5 + $0x18] sm:$0xff] %vm370, %v1047
          %1056 = vst.msk [vmem:[#allocation5 + $0x20] sm:$0xff] %vm370, %v1048
          %1057 = vst.msk [vmem:[#allocation5 + $0x28] sm:$0xff] %vm370, %v1049
          %1058 = vst.msk [vmem:[#allocation5 + $0x30] sm:$0xff] %vm370, %v1050
          %1059 = vst.msk [vmem:[#allocation5 + $0x38] sm:$0xff] %vm370, %v1051
        $region60: #{att_forward.1} parent=55 // pred_fallthru
          _
        %s1060 = smul.u32 %s27, 128
        %s1061 = sshra.s32 %s1060, 7
        %s1062 = sand.u32 %s1060, 127
        %s1063 = smul.addr %s1061, 8
        %s1064 = scalar_lea.vmem %s342, %s1063
        %v1065 = vld [vmem:[%s1064] sm:$0xff]
        %v1066 = vld [vmem:[%s1064 + $0x10] sm:$0xff]
        %v1067 = vld [vmem:[%s1064 + $0x20] sm:$0xff]
        %v1068 = vld [vmem:[%s1064 + $0x30] sm:$0xff]
        %v1069 = vld [vmem:[%s1064 + $0x40] sm:$0xff]
        %v1070 = vld [vmem:[%s1064 + $0x50] sm:$0xff]
        %v1071 = vld [vmem:[%s1064 + $0x60] sm:$0xff]
        %v1072 = vld [vmem:[%s1064 + $0x70] sm:$0xff]
        %1073 = vxpose.xlu0.b32.start [1/16] %v1065, 128
        %1074 = vxpose.xlu0.b32.cont [2/16] %v1066, 128
        %1075 = vxpose.xlu0.b32.cont [3/16] %v1067, 128
        %1076 = vxpose.xlu0.b32.cont [4/16] %v1068, 128
        %1077 = vxpose.xlu0.b32.cont [5/16] %v1069, 128
        %1078 = vxpose.xlu0.b32.cont [6/16] %v1070, 128
        %1079 = vxpose.xlu0.b32.cont [7/16] %v1071, 128
        %1080 = vxpose.xlu0.b32.cont [8/16] %v1072, 128
        %1081 = vxpose.xlu0.b32.cont [9/16] 0.0, 128
        %1082 = vxpose.xlu0.b32.cont [10/16] 0.0, 128
        %1083 = vxpose.xlu0.b32.cont [11/16] 0.0, 128
        %1084 = vxpose.xlu0.b32.cont [12/16] 0.0, 128
        %1085 = vxpose.xlu0.b32.cont [13/16] 0.0, 128
        %1086 = vxpose.xlu0.b32.cont [14/16] 0.0, 128
        %1087 = vxpose.xlu0.b32.cont [15/16] 0.0, 128
        %1088 = vxpose.xlu0.b32.end [16/16] 0.0, 128
        %v1089 = vpop.trf.xlu0
        %v1090 = vpop.trf.xlu0
        %v1091 = vpop.trf.xlu0
        %v1092 = vpop.trf.xlu0
        %v1093 = vpop.trf.xlu0
        %v1094 = vpop.trf.xlu0
        %v1095 = vpop.trf.xlu0
        %v1096 = vpop.trf.xlu0
        %v1097 = vpop.trf.xlu0
        %v1098 = vpop.trf.xlu0
        %v1099 = vpop.trf.xlu0
        %v1100 = vpop.trf.xlu0
        %v1101 = vpop.trf.xlu0
        %v1102 = vpop.trf.xlu0
        %v1103 = vpop.trf.xlu0
        %v1104 = vpop.trf.xlu0
        %v1105 = vld [vmem:[#allocation2] sm:$0xff]
        %v1106 = vld [vmem:[#allocation2 + $0x8] sm:$0xff]
        %v1107 = vld [vmem:[#allocation2 + $0x10] sm:$0xff]
        %v1108 = vld [vmem:[#allocation2 + $0x18] sm:$0xff]
        %v1109 = vld [vmem:[#allocation2 + $0x20] sm:$0xff]
        %v1110 = vld [vmem:[#allocation2 + $0x28] sm:$0xff]
        %v1111 = vld [vmem:[#allocation2 + $0x30] sm:$0xff]
        %v1112 = vld [vmem:[#allocation2 + $0x38] sm:$0xff]
        %v1113 = vld [vmem:[#allocation2 + $0x40] sm:$0xff]
        %v1114 = vld [vmem:[#allocation2 + $0x48] sm:$0xff]
        %v1115 = vld [vmem:[#allocation2 + $0x50] sm:$0xff]
        %v1116 = vld [vmem:[#allocation2 + $0x58] sm:$0xff]
        %v1117 = vld [vmem:[#allocation2 + $0x60] sm:$0xff]
        %v1118 = vld [vmem:[#allocation2 + $0x68] sm:$0xff]
        %v1119 = vld [vmem:[#allocation2 + $0x70] sm:$0xff]
        %v1120 = vld [vmem:[#allocation2 + $0x78] sm:$0xff]
        %v1121 = vld [vmem:[#allocation3] sm:$0x3]
        %v1123 = vlaneseq
        %v1124 = vshrl.u32 %v1123, 7
        %v1125 = vsub.s32 0, %v1124
        %v1126 = vrot.slane %v1121, %v1125
        %v1127 = vlaneseq
        %v1128 = vshrl.u32 %v1127, 7
        %v1129 = vsub.s32 1, %v1128
        %v1130 = vrot.slane %v1121, %v1129
        %vm1133 = vcmask 523264
        %v1135 = vsel %vm1133, %v1089, 0
        %v1138 = vsel %vm1133, %v1090, 0
        %v1141 = vsel %vm1133, %v1091, 0
        %v1144 = vsel %vm1133, %v1092, 0
        %v1147 = vsel %vm1133, %v1093, 0
        %v1150 = vsel %vm1133, %v1094, 0
        %v1153 = vsel %vm1133, %v1095, 0
        %v1156 = vsel %vm1133, %v1096, 0
        %v1159 = vsel %vm1133, %v1097, 0
        %v1162 = vsel %vm1133, %v1098, 0
        %v1165 = vsel %vm1133, %v1099, 0
        %v1168 = vsel %vm1133, %v1100, 0
        %v1171 = vsel %vm1133, %v1101, 0
        %v1174 = vsel %vm1133, %v1102, 0
        %v1177 = vsel %vm1133, %v1103, 0
        %v1180 = vsel %vm1133, %v1104, 0
        %1182 = vmatprep.subr.mxu0 0.0
        %1183 = vmatpush1.msra.mxu0 0.0
        %1184 = vmatprep.subr.mxu0 0.0
        %1185 = vmatpush1.msra.mxu0 0.0
        %1186 = vmatprep.subr.mxu0 0.0
        %1187 = vmatpush1.msra.mxu0 0.0
        %1188 = vmatprep.subr.mxu0 0.0
        %1189 = vmatpush1.msra.mxu0 0.0
        %1190 = vmatprep.subr.mxu0 0.0
        %1191 = vmatpush1.msra.mxu0 0.0
        %1192 = vmatprep.subr.mxu0 0.0
        %1193 = vmatpush1.msra.mxu0 0.0
        %1194 = vmatprep.subr.mxu0 0.0
        %1195 = vmatpush1.msra.mxu0 0.0
        %1196 = vmatprep.subr.mxu0 0.0
        %1197 = vmatpush1.msra.mxu0 0.0
        %1198 = vmatprep.subr.mxu0 %v1120
        %1199 = vmatpush1.msra.mxu0 %v1119
        %1200 = vmatprep.subr.mxu0 %v1118
        %1201 = vmatpush1.msra.mxu0 %v1117
        %1202 = vmatprep.subr.mxu0 %v1116
        %1203 = vmatpush1.msra.mxu0 %v1115
        %1204 = vmatprep.subr.mxu0 %v1114
        %1205 = vmatpush1.msra.mxu0 %v1113
        %1206 = vmatprep.subr.mxu0 %v1112
        %1207 = vmatpush1.msra.mxu0 %v1111
        %1208 = vmatprep.subr.mxu0 %v1110
        %1209 = vmatpush1.msra.mxu0 %v1109
        %1210 = vmatprep.subr.mxu0 %v1108
        %1211 = vmatpush1.msra.mxu0 %v1107
        %1212 = vmatprep.subr.mxu0 %v1106
        %1213 = vmatpush1.msra.mxu0 %v1105
        %1214 = vmatprep.subr.mxu0 0.0
        %1215 = vmatpush2.msra.mxu0 0.0
        %1216 = vmatprep.subr.mxu0 0.0
        %1217 = vmatpush2.msra.mxu0 0.0
        %1218 = vmatprep.subr.mxu0 0.0
        %1219 = vmatpush2.msra.mxu0 0.0
        %1220 = vmatprep.subr.mxu0 0.0
        %1221 = vmatpush2.msra.mxu0 0.0
        %1222 = vmatprep.subr.mxu0 0.0
        %1223 = vmatpush2.msra.mxu0 0.0
        %1224 = vmatprep.subr.mxu0 0.0
        %1225 = vmatpush2.msra.mxu0 0.0
        %1226 = vmatprep.subr.mxu0 0.0
        %1227 = vmatpush2.msra.mxu0 0.0
        %1228 = vmatprep.subr.mxu0 0.0
        %1229 = vmatpush2.msra.mxu0 0.0
        %1230 = vmatprep.subr.mxu0 0.0
        %1231 = vmatpush2.msra.mxu0 0.0
        %1232 = vmatprep.subr.mxu0 0.0
        %1233 = vmatpush2.msra.mxu0 0.0
        %1234 = vmatprep.subr.mxu0 0.0
        %1235 = vmatpush2.msra.mxu0 0.0
        %1236 = vmatprep.subr.mxu0 0.0
        %1237 = vmatpush2.msra.mxu0 0.0
        %1238 = vmatprep.subr.mxu0 0.0
        %1239 = vmatpush2.msra.mxu0 0.0
        %1240 = vmatprep.subr.mxu0 0.0
        %1241 = vmatpush2.msra.mxu0 0.0
        %1242 = vmatprep.subr.mxu0 0.0
        %1243 = vmatpush2.msra.mxu0 0.0
        %1244 = vmatprep.subr.mxu0 0.0
        %1245 = vmatpush2.msra.mxu0 0.0
        %1246 = vmatprep.mubr.f32.mxu0 0.0
        %1247 = vmatmul.mubr.f32.gmra.mxu0 %v1135
        %v1248 = vpop.f32.mrf.mxu0
        %v1249 = vadd.f32 %v1126, %v1248
        %v1250 = vpop.f32.mrf.mxu0
        %v1251 = vadd.f32 %v1130, %v1250
        %1252 = vmatprep.mubr.f32.mxu0 0.0
        %1253 = vmatmul.mubr.f32.gmra.mxu0 %v1138
        %v1254 = vpop.f32.mrf.mxu0
        %v1255 = vadd.f32 %v1126, %v1254
        %v1256 = vpop.f32.mrf.mxu0
        %v1257 = vadd.f32 %v1130, %v1256
        %1258 = vmatprep.mubr.f32.mxu0 0.0
        %1259 = vmatmul.mubr.f32.gmra.mxu0 %v1141
        %v1260 = vpop.f32.mrf.mxu0
        %v1261 = vadd.f32 %v1126, %v1260
        %v1262 = vpop.f32.mrf.mxu0
        %v1263 = vadd.f32 %v1130, %v1262
        %1264 = vmatprep.mubr.f32.mxu0 0.0
        %1265 = vmatmul.mubr.f32.gmra.mxu0 %v1144
        %v1266 = vpop.f32.mrf.mxu0
        %v1267 = vadd.f32 %v1126, %v1266
        %v1268 = vpop.f32.mrf.mxu0
        %v1269 = vadd.f32 %v1130, %v1268
        %1270 = vmatprep.mubr.f32.mxu0 0.0
        %1271 = vmatmul.mubr.f32.gmra.mxu0 %v1147
        %v1272 = vpop.f32.mrf.mxu0
        %v1273 = vadd.f32 %v1126, %v1272
        %v1274 = vpop.f32.mrf.mxu0
        %v1275 = vadd.f32 %v1130, %v1274
        %1276 = vmatprep.mubr.f32.mxu0 0.0
        %1277 = vmatmul.mubr.f32.gmra.mxu0 %v1150
        %v1278 = vpop.f32.mrf.mxu0
        %v1279 = vadd.f32 %v1126, %v1278
        %v1280 = vpop.f32.mrf.mxu0
        %v1281 = vadd.f32 %v1130, %v1280
        %1282 = vmatprep.mubr.f32.mxu0 0.0
        %1283 = vmatmul.mubr.f32.gmra.mxu0 %v1153
        %v1284 = vpop.f32.mrf.mxu0
        %v1285 = vadd.f32 %v1126, %v1284
        %v1286 = vpop.f32.mrf.mxu0
        %v1287 = vadd.f32 %v1130, %v1286
        %1288 = vmatprep.mubr.f32.mxu0 0.0
        %1289 = vmatmul.mubr.f32.gmra.mxu0 %v1156
        %v1290 = vpop.f32.mrf.mxu0
        %v1291 = vadd.f32 %v1126, %v1290
        %v1292 = vpop.f32.mrf.mxu0
        %v1293 = vadd.f32 %v1130, %v1292
        %1294 = vmatprep.mubr.f32.mxu0 0.0
        %1295 = vmatmul.mubr.f32.gmra.mxu0 %v1159
        %v1296 = vpop.f32.mrf.mxu0
        %v1297 = vadd.f32 %v1126, %v1296
        %v1298 = vpop.f32.mrf.mxu0
        %v1299 = vadd.f32 %v1130, %v1298
        %1300 = vmatprep.mubr.f32.mxu0 0.0
        %1301 = vmatmul.mubr.f32.gmra.mxu0 %v1162
        %v1302 = vpop.f32.mrf.mxu0
        %v1303 = vadd.f32 %v1126, %v1302
        %v1304 = vpop.f32.mrf.mxu0
        %v1305 = vadd.f32 %v1130, %v1304
        %1306 = vmatprep.mubr.f32.mxu0 0.0
        %1307 = vmatmul.mubr.f32.gmra.mxu0 %v1165
        %v1308 = vpop.f32.mrf.mxu0
        %v1309 = vadd.f32 %v1126, %v1308
        %v1310 = vpop.f32.mrf.mxu0
        %v1311 = vadd.f32 %v1130, %v1310
        %1312 = vmatprep.mubr.f32.mxu0 0.0
        %1313 = vmatmul.mubr.f32.gmra.mxu0 %v1168
        %v1314 = vpop.f32.mrf.mxu0
        %v1315 = vadd.f32 %v1126, %v1314
        %v1316 = vpop.f32.mrf.mxu0
        %v1317 = vadd.f32 %v1130, %v1316
        %1318 = vmatprep.mubr.f32.mxu0 0.0
        %1319 = vmatmul.mubr.f32.gmra.mxu0 %v1171
        %v1320 = vpop.f32.mrf.mxu0
        %v1321 = vadd.f32 %v1126, %v1320
        %v1322 = vpop.f32.mrf.mxu0
        %v1323 = vadd.f32 %v1130, %v1322
        %1324 = vmatprep.mubr.f32.mxu0 0.0
        %1325 = vmatmul.mubr.f32.gmra.mxu0 %v1174
        %v1326 = vpop.f32.mrf.mxu0
        %v1327 = vadd.f32 %v1126, %v1326
        %v1328 = vpop.f32.mrf.mxu0
        %v1329 = vadd.f32 %v1130, %v1328
        %1330 = vmatprep.mubr.f32.mxu0 0.0
        %1331 = vmatmul.mubr.f32.gmra.mxu0 %v1177
        %v1332 = vpop.f32.mrf.mxu0
        %v1333 = vadd.f32 %v1126, %v1332
        %v1334 = vpop.f32.mrf.mxu0
        %v1335 = vadd.f32 %v1130, %v1334
        %1336 = vmatprep.mubr.f32.mxu0 0.0
        %1337 = vmatmul.mubr.f32.gmra.mxu0 %v1180
        %v1338 = vpop.f32.mrf.mxu0
        %v1339 = vadd.f32 %v1126, %v1338
        %v1340 = vpop.f32.mrf.mxu0
        %v1341 = vadd.f32 %v1130, %v1340
        %1342 = vdwg.mxu0
        %v1343 = vmax.f32 %v1249, %v1251
        %1344 = vmax.xlane.f32.xlu0 %v1343
        %v1345 = vpop.xlane.xlu0 %1344
        %v1346 = vmax.f32 %v1255, %v1257
        %1347 = vmax.xlane.f32.xlu0 %v1346
        %v1348 = vpop.xlane.xlu0 %1347
        %v1349 = vmax.f32 %v1261, %v1263
        %1350 = vmax.xlane.f32.xlu0 %v1349
        %v1351 = vpop.xlane.xlu0 %1350
        %v1352 = vmax.f32 %v1267, %v1269
        %1353 = vmax.xlane.f32.xlu0 %v1352
        %v1354 = vpop.xlane.xlu0 %1353
        %v1355 = vmax.f32 %v1273, %v1275
        %1356 = vmax.xlane.f32.xlu0 %v1355
        %v1357 = vpop.xlane.xlu0 %1356
        %v1358 = vmax.f32 %v1279, %v1281
        %1359 = vmax.xlane.f32.xlu0 %v1358
        %v1360 = vpop.xlane.xlu0 %1359
        %v1361 = vmax.f32 %v1285, %v1287
        %1362 = vmax.xlane.f32.xlu0 %v1361
        %v1363 = vpop.xlane.xlu0 %1362
        %v1364 = vmax.f32 %v1291, %v1293
        %1365 = vmax.xlane.f32.xlu0 %v1364
        %v1366 = vpop.xlane.xlu0 %1365
        %v1367 = vmax.f32 %v1297, %v1299
        %1368 = vmax.xlane.f32.xlu0 %v1367
        %v1369 = vpop.xlane.xlu0 %1368
        %v1370 = vmax.f32 %v1303, %v1305
        %1371 = vmax.xlane.f32.xlu0 %v1370
        %v1372 = vpop.xlane.xlu0 %1371
        %v1373 = vmax.f32 %v1309, %v1311
        %1374 = vmax.xlane.f32.xlu0 %v1373
        %v1375 = vpop.xlane.xlu0 %1374
        %v1376 = vmax.f32 %v1315, %v1317
        %1377 = vmax.xlane.f32.xlu0 %v1376
        %v1378 = vpop.xlane.xlu0 %1377
        %v1379 = vmax.f32 %v1321, %v1323
        %1380 = vmax.xlane.f32.xlu0 %v1379
        %v1381 = vpop.xlane.xlu0 %1380
        %v1382 = vmax.f32 %v1327, %v1329
        %1383 = vmax.xlane.f32.xlu0 %v1382
        %v1384 = vpop.xlane.xlu0 %1383
        %v1385 = vmax.f32 %v1333, %v1335
        %1386 = vmax.xlane.f32.xlu0 %v1385
        %v1387 = vpop.xlane.xlu0 %1386
        %v1388 = vmax.f32 %v1339, %v1341
        %1389 = vmax.xlane.f32.xlu0 %v1388
        %v1390 = vpop.xlane.xlu0 %1389
        %v1391 = vsub.f32 %v1249, %v1345
        %v1392 = vsub.f32 %v1251, %v1345
        %v1393 = vsub.f32 %v1255, %v1348
        %v1394 = vsub.f32 %v1257, %v1348
        %v1395 = vsub.f32 %v1261, %v1351
        %v1396 = vsub.f32 %v1263, %v1351
        %v1397 = vsub.f32 %v1267, %v1354
        %v1398 = vsub.f32 %v1269, %v1354
        %v1399 = vsub.f32 %v1273, %v1357
        %v1400 = vsub.f32 %v1275, %v1357
        %v1401 = vsub.f32 %v1279, %v1360
        %v1402 = vsub.f32 %v1281, %v1360
        %v1403 = vsub.f32 %v1285, %v1363
        %v1404 = vsub.f32 %v1287, %v1363
        %v1405 = vsub.f32 %v1291, %v1366
        %v1406 = vsub.f32 %v1293, %v1366
        %v1407 = vsub.f32 %v1297, %v1369
        %v1408 = vsub.f32 %v1299, %v1369
        %v1409 = vsub.f32 %v1303, %v1372
        %v1410 = vsub.f32 %v1305, %v1372
        %v1411 = vsub.f32 %v1309, %v1375
        %v1412 = vsub.f32 %v1311, %v1375
        %v1413 = vsub.f32 %v1315, %v1378
        %v1414 = vsub.f32 %v1317, %v1378
        %v1415 = vsub.f32 %v1321, %v1381
        %v1416 = vsub.f32 %v1323, %v1381
        %v1417 = vsub.f32 %v1327, %v1384
        %v1418 = vsub.f32 %v1329, %v1384
        %v1419 = vsub.f32 %v1333, %v1387
        %v1420 = vsub.f32 %v1335, %v1387
        %v1421 = vsub.f32 %v1339, %v1390
        %v1422 = vsub.f32 %v1341, %v1390
        %v1423 = vmul.f32 %v1391, 1.442695
        %v1424 = vpow.pop %v1423
        %v1425 = vmul.f32 %v1392, 1.442695
        %v1426 = vpow.pop %v1425
        %v1427 = vmul.f32 %v1393, 1.442695
        %v1428 = vpow.pop %v1427
        %v1429 = vmul.f32 %v1394, 1.442695
        %v1430 = vpow.pop %v1429
        %v1431 = vmul.f32 %v1395, 1.442695
        %v1432 = vpow.pop %v1431
        %v1433 = vmul.f32 %v1396, 1.442695
        %v1434 = vpow.pop %v1433
        %v1435 = vmul.f32 %v1397, 1.442695
        %v1436 = vpow.pop %v1435
        %v1437 = vmul.f32 %v1398, 1.442695
        %v1438 = vpow.pop %v1437
        %v1439 = vmul.f32 %v1399, 1.442695
        %v1440 = vpow.pop %v1439
        %v1441 = vmul.f32 %v1400, 1.442695
        %v1442 = vpow.pop %v1441
        %v1443 = vmul.f32 %v1401, 1.442695
        %v1444 = vpow.pop %v1443
        %v1445 = vmul.f32 %v1402, 1.442695
        %v1446 = vpow.pop %v1445
        %v1447 = vmul.f32 %v1403, 1.442695
        %v1448 = vpow.pop %v1447
        %v1449 = vmul.f32 %v1404, 1.442695
        %v1450 = vpow.pop %v1449
        %v1451 = vmul.f32 %v1405, 1.442695
        %v1452 = vpow.pop %v1451
        %v1453 = vmul.f32 %v1406, 1.442695
        %v1454 = vpow.pop %v1453
        %v1455 = vmul.f32 %v1407, 1.442695
        %v1456 = vpow.pop %v1455
        %v1457 = vmul.f32 %v1408, 1.442695
        %v1458 = vpow.pop %v1457
        %v1459 = vmul.f32 %v1409, 1.442695
        %v1460 = vpow.pop %v1459
        %v1461 = vmul.f32 %v1410, 1.442695
        %v1462 = vpow.pop %v1461
        %v1463 = vmul.f32 %v1411, 1.442695
        %v1464 = vpow.pop %v1463
        %v1465 = vmul.f32 %v1412, 1.442695
        %v1466 = vpow.pop %v1465
        %v1467 = vmul.f32 %v1413, 1.442695
        %v1468 = vpow.pop %v1467
        %v1469 = vmul.f32 %v1414, 1.442695
        %v1470 = vpow.pop %v1469
        %v1471 = vmul.f32 %v1415, 1.442695
        %v1472 = vpow.pop %v1471
        %v1473 = vmul.f32 %v1416, 1.442695
        %v1474 = vpow.pop %v1473
        %v1475 = vmul.f32 %v1417, 1.442695
        %v1476 = vpow.pop %v1475
        %v1477 = vmul.f32 %v1418, 1.442695
        %v1478 = vpow.pop %v1477
        %v1479 = vmul.f32 %v1419, 1.442695
        %v1480 = vpow.pop %v1479
        %v1481 = vmul.f32 %v1420, 1.442695
        %v1482 = vpow.pop %v1481
        %v1483 = vmul.f32 %v1421, 1.442695
        %v1484 = vpow.pop %v1483
        %v1485 = vmul.f32 %v1422, 1.442695
        %v1486 = vpow.pop %v1485
        %1487 = vmatprep.subr.mxu0 %v1486
        %1488 = vmatpush1.xpose.msra.mxu0 %v1484
        %1489 = vmatprep.subr.mxu0 %v1482
        %1490 = vmatpush1.xpose.msra.mxu0 %v1480
        %1491 = vmatprep.subr.mxu0 %v1478
        %1492 = vmatpush1.xpose.msra.mxu0 %v1476
        %1493 = vmatprep.subr.mxu0 %v1474
        %1494 = vmatpush1.xpose.msra.mxu0 %v1472
        %1495 = vmatprep.subr.mxu0 %v1470
        %1496 = vmatpush1.xpose.msra.mxu0 %v1468
        %1497 = vmatprep.subr.mxu0 %v1466
        %1498 = vmatpush1.xpose.msra.mxu0 %v1464
        %1499 = vmatprep.subr.mxu0 %v1462
        %1500 = vmatpush1.xpose.msra.mxu0 %v1460
        %1501 = vmatprep.subr.mxu0 %v1458
        %1502 = vmatpush1.xpose.msra.mxu0 %v1456
        %1503 = vmatprep.subr.mxu0 %v1454
        %1504 = vmatpush1.xpose.msra.mxu0 %v1452
        %1505 = vmatprep.subr.mxu0 %v1450
        %1506 = vmatpush1.xpose.msra.mxu0 %v1448
        %1507 = vmatprep.subr.mxu0 %v1446
        %1508 = vmatpush1.xpose.msra.mxu0 %v1444
        %1509 = vmatprep.subr.mxu0 %v1442
        %1510 = vmatpush1.xpose.msra.mxu0 %v1440
        %1511 = vmatprep.subr.mxu0 %v1438
        %1512 = vmatpush1.xpose.msra.mxu0 %v1436
        %1513 = vmatprep.subr.mxu0 %v1434
        %1514 = vmatpush1.xpose.msra.mxu0 %v1432
        %1515 = vmatprep.subr.mxu0 %v1430
        %1516 = vmatpush1.xpose.msra.mxu0 %v1428
        %1517 = vmatprep.subr.mxu0 %v1426
        %1518 = vmatpush1.xpose.msra.mxu0 %v1424
        %1519 = vmatprep.subr.mxu0 0.0
        %1520 = vmatpush2.xpose.msra.mxu0 0.0
        %1521 = vmatprep.subr.mxu0 0.0
        %1522 = vmatpush2.xpose.msra.mxu0 0.0
        %1523 = vmatprep.subr.mxu0 0.0
        %1524 = vmatpush2.xpose.msra.mxu0 0.0
        %1525 = vmatprep.subr.mxu0 0.0
        %1526 = vmatpush2.xpose.msra.mxu0 0.0
        %1527 = vmatprep.subr.mxu0 0.0
        %1528 = vmatpush2.xpose.msra.mxu0 0.0
        %1529 = vmatprep.subr.mxu0 0.0
        %1530 = vmatpush2.xpose.msra.mxu0 0.0
        %1531 = vmatprep.subr.mxu0 0.0
        %1532 = vmatpush2.xpose.msra.mxu0 0.0
        %1533 = vmatprep.subr.mxu0 0.0
        %1534 = vmatpush2.xpose.msra.mxu0 0.0
        %1535 = vmatprep.subr.mxu0 0.0
        %1536 = vmatpush2.xpose.msra.mxu0 0.0
        %1537 = vmatprep.subr.mxu0 0.0
        %1538 = vmatpush2.xpose.msra.mxu0 0.0
        %1539 = vmatprep.subr.mxu0 0.0
        %1540 = vmatpush2.xpose.msra.mxu0 0.0
        %1541 = vmatprep.subr.mxu0 0.0
        %1542 = vmatpush2.xpose.msra.mxu0 0.0
        %1543 = vmatprep.subr.mxu0 0.0
        %1544 = vmatpush2.xpose.msra.mxu0 0.0
        %1545 = vmatprep.subr.mxu0 0.0
        %1546 = vmatpush2.xpose.msra.mxu0 0.0
        %1547 = vmatprep.subr.mxu0 0.0
        %1548 = vmatpush2.xpose.msra.mxu0 0.0
        %1549 = vmatprep.subr.mxu0 0.0
        %1550 = vmatpush2.xpose.msra.mxu0 0.0
        %1551 = vmatprep.mubr.f32.mxu0 1.0
        %1552 = vmatmul.mubr.f32.gmra.mxu0 1.0
        %v1553 = vpop.f32.mrf.mxu0
        %v1554 = vadd.f32 0.0, %v1553
        %v1555 = vpop.f32.mrf.mxu0
        %1556 = vdwg.mxu0
        %v1557 = vrcp.pop %v1554
        %v1558 = vld [vmem:[#allocation4] sm:$0xff]
        %v1559 = vld [vmem:[#allocation4 + $0x8] sm:$0xff]
        %v1560 = vld [vmem:[#allocation4 + $0x10] sm:$0xff]
        %v1561 = vld [vmem:[#allocation4 + $0x18] sm:$0xff]
        %v1562 = vld [vmem:[#allocation4 + $0x20] sm:$0xff]
        %v1563 = vld [vmem:[#allocation4 + $0x28] sm:$0xff]
        %v1564 = vld [vmem:[#allocation4 + $0x30] sm:$0xff]
        %v1565 = vld [vmem:[#allocation4 + $0x38] sm:$0xff]
        %v1566 = vld [vmem:[#allocation4 + $0x40] sm:$0xff]
        %v1567 = vld [vmem:[#allocation4 + $0x48] sm:$0xff]
        %v1568 = vld [vmem:[#allocation4 + $0x50] sm:$0xff]
        %v1569 = vld [vmem:[#allocation4 + $0x58] sm:$0xff]
        %v1570 = vld [vmem:[#allocation4 + $0x60] sm:$0xff]
        %v1571 = vld [vmem:[#allocation4 + $0x68] sm:$0xff]
        %v1572 = vld [vmem:[#allocation4 + $0x70] sm:$0xff]
        %v1573 = vld [vmem:[#allocation4 + $0x78] sm:$0xff]
        %1574 = vmatprep.subr.mxu0 %v1486
        %1575 = vmatpush1.xpose.msra.mxu0 %v1484
        %1576 = vmatprep.subr.mxu0 %v1482
        %1577 = vmatpush1.xpose.msra.mxu0 %v1480
        %1578 = vmatprep.subr.mxu0 %v1478
        %1579 = vmatpush1.xpose.msra.mxu0 %v1476
        %1580 = vmatprep.subr.mxu0 %v1474
        %1581 = vmatpush1.xpose.msra.mxu0 %v1472
        %1582 = vmatprep.subr.mxu0 %v1470
        %1583 = vmatpush1.xpose.msra.mxu0 %v1468
        %1584 = vmatprep.subr.mxu0 %v1466
        %1585 = vmatpush1.xpose.msra.mxu0 %v1464
        %1586 = vmatprep.subr.mxu0 %v1462
        %1587 = vmatpush1.xpose.msra.mxu0 %v1460
        %1588 = vmatprep.subr.mxu0 %v1458
        %1589 = vmatpush1.xpose.msra.mxu0 %v1456
        %1590 = vmatprep.subr.mxu0 %v1454
        %1591 = vmatpush1.xpose.msra.mxu0 %v1452
        %1592 = vmatprep.subr.mxu0 %v1450
        %1593 = vmatpush1.xpose.msra.mxu0 %v1448
        %1594 = vmatprep.subr.mxu0 %v1446
        %1595 = vmatpush1.xpose.msra.mxu0 %v1444
        %1596 = vmatprep.subr.mxu0 %v1442
        %1597 = vmatpush1.xpose.msra.mxu0 %v1440
        %1598 = vmatprep.subr.mxu0 %v1438
        %1599 = vmatpush1.xpose.msra.mxu0 %v1436
        %1600 = vmatprep.subr.mxu0 %v1434
        %1601 = vmatpush1.xpose.msra.mxu0 %v1432
        %1602 = vmatprep.subr.mxu0 %v1430
        %1603 = vmatpush1.xpose.msra.mxu0 %v1428
        %1604 = vmatprep.subr.mxu0 %v1426
        %1605 = vmatpush1.xpose.msra.mxu0 %v1424
        %1606 = vmatprep.subr.mxu0 0.0
        %1607 = vmatpush2.xpose.msra.mxu0 0.0
        %1608 = vmatprep.subr.mxu0 0.0
        %1609 = vmatpush2.xpose.msra.mxu0 0.0
        %1610 = vmatprep.subr.mxu0 0.0
        %1611 = vmatpush2.xpose.msra.mxu0 0.0
        %1612 = vmatprep.subr.mxu0 0.0
        %1613 = vmatpush2.xpose.msra.mxu0 0.0
        %1614 = vmatprep.subr.mxu0 0.0
        %1615 = vmatpush2.xpose.msra.mxu0 0.0
        %1616 = vmatprep.subr.mxu0 0.0
        %1617 = vmatpush2.xpose.msra.mxu0 0.0
        %1618 = vmatprep.subr.mxu0 0.0
        %1619 = vmatpush2.xpose.msra.mxu0 0.0
        %1620 = vmatprep.subr.mxu0 0.0
        %1621 = vmatpush2.xpose.msra.mxu0 0.0
        %1622 = vmatprep.subr.mxu0 0.0
        %1623 = vmatpush2.xpose.msra.mxu0 0.0
        %1624 = vmatprep.subr.mxu0 0.0
        %1625 = vmatpush2.xpose.msra.mxu0 0.0
        %1626 = vmatprep.subr.mxu0 0.0
        %1627 = vmatpush2.xpose.msra.mxu0 0.0
        %1628 = vmatprep.subr.mxu0 0.0
        %1629 = vmatpush2.xpose.msra.mxu0 0.0
        %1630 = vmatprep.subr.mxu0 0.0
        %1631 = vmatpush2.xpose.msra.mxu0 0.0
        %1632 = vmatprep.subr.mxu0 0.0
        %1633 = vmatpush2.xpose.msra.mxu0 0.0
        %1634 = vmatprep.subr.mxu0 0.0
        %1635 = vmatpush2.xpose.msra.mxu0 0.0
        %1636 = vmatprep.subr.mxu0 0.0
        %1637 = vmatpush2.xpose.msra.mxu0 0.0
        %1638 = vmatprep.mubr.f32.mxu0 %v1559
        %1639 = vmatmul.mubr.f32.gmra.mxu0 %v1558
        %v1640 = vpop.f32.mrf.mxu0
        %v1641 = vadd.f32 0.0, %v1640
        %v1642 = vpop.f32.mrf.mxu0
        %1643 = vmatprep.mubr.f32.mxu0 %v1561
        %1644 = vmatmul.mubr.f32.gmra.mxu0 %v1560
        %v1645 = vpop.f32.mrf.mxu0
        %v1646 = vadd.f32 0.0, %v1645
        %v1647 = vpop.f32.mrf.mxu0
        %1648 = vmatprep.mubr.f32.mxu0 %v1563
        %1649 = vmatmul.mubr.f32.gmra.mxu0 %v1562
        %v1650 = vpop.f32.mrf.mxu0
        %v1651 = vadd.f32 0.0, %v1650
        %v1652 = vpop.f32.mrf.mxu0
        %1653 = vmatprep.mubr.f32.mxu0 %v1565
        %1654 = vmatmul.mubr.f32.gmra.mxu0 %v1564
        %v1655 = vpop.f32.mrf.mxu0
        %v1656 = vadd.f32 0.0, %v1655
        %v1657 = vpop.f32.mrf.mxu0
        %1658 = vmatprep.mubr.f32.mxu0 %v1567
        %1659 = vmatmul.mubr.f32.gmra.mxu0 %v1566
        %v1660 = vpop.f32.mrf.mxu0
        %v1661 = vadd.f32 0.0, %v1660
        %v1662 = vpop.f32.mrf.mxu0
        %1663 = vmatprep.mubr.f32.mxu0 %v1569
        %1664 = vmatmul.mubr.f32.gmra.mxu0 %v1568
        %v1665 = vpop.f32.mrf.mxu0
        %v1666 = vadd.f32 0.0, %v1665
        %v1667 = vpop.f32.mrf.mxu0
        %1668 = vmatprep.mubr.f32.mxu0 %v1571
        %1669 = vmatmul.mubr.f32.gmra.mxu0 %v1570
        %v1670 = vpop.f32.mrf.mxu0
        %v1671 = vadd.f32 0.0, %v1670
        %v1672 = vpop.f32.mrf.mxu0
        %1673 = vmatprep.mubr.f32.mxu0 %v1573
        %1674 = vmatmul.mubr.f32.gmra.mxu0 %v1572
        %v1675 = vpop.f32.mrf.mxu0
        %v1676 = vadd.f32 0.0, %v1675
        %v1677 = vpop.f32.mrf.mxu0
        %1678 = vdwg.mxu0
        %s1679 = sld [smem:[#allocation6]]
        %s1680 = sld [smem:[#allocation7]]
        %v1681 = vlaneseq
        %v1682 = vshrl.u32 %v1681, 7
        %v1683 = vsub.s32 0, %v1682
        %v1684 = vrot.slane %v1557, %v1683
        %v1685 = vmul.f32 %v1641, %v1684
        %v1686 = vmul.f32 %v1646, %v1684
        %v1687 = vmul.f32 %v1651, %v1684
        %v1688 = vmul.f32 %v1656, %v1684
        %v1689 = vmul.f32 %v1661, %v1684
        %v1690 = vmul.f32 %v1666, %v1684
        %v1691 = vmul.f32 %v1671, %v1684
        %v1692 = vmul.f32 %v1676, %v1684
        %v1693 = vstv %s1679
        %v1694 = vmul.f32 %v1693, %v1685
        %v1695 = vmul.f32 %v1693, %v1686
        %v1696 = vmul.f32 %v1693, %v1687
        %v1697 = vmul.f32 %v1693, %v1688
        %v1698 = vmul.f32 %v1693, %v1689
        %v1699 = vmul.f32 %v1693, %v1690
        %v1700 = vmul.f32 %v1693, %v1691
        %v1701 = vmul.f32 %v1693, %v1692
        %v1702 = vadd.f32 %v1694, %v1065
        %v1703 = vadd.f32 %v1695, %v1066
        %v1704 = vadd.f32 %v1696, %v1067
        %v1705 = vadd.f32 %v1697, %v1068
        %v1706 = vadd.f32 %v1698, %v1069
        %v1707 = vadd.f32 %v1699, %v1070
        %v1708 = vadd.f32 %v1700, %v1071
        %v1709 = vadd.f32 %v1701, %v1072
        %v1710 = vld [vmem:[#allocation5] sm:$0xff]
        %v1711 = vld [vmem:[#allocation5 + $0x8] sm:$0xff]
        %v1712 = vld [vmem:[#allocation5 + $0x10] sm:$0xff]
        %v1713 = vld [vmem:[#allocation5 + $0x18] sm:$0xff]
        %v1714 = vld [vmem:[#allocation5 + $0x20] sm:$0xff]
        %v1715 = vld [vmem:[#allocation5 + $0x28] sm:$0xff]
        %v1716 = vld [vmem:[#allocation5 + $0x30] sm:$0xff]
        %v1717 = vld [vmem:[#allocation5 + $0x38] sm:$0xff]
        %v1719 = vsel %vm1133, %v1710, 0
        %v1722 = vsel %vm1133, %v1711, 0
        %v1725 = vsel %vm1133, %v1712, 0
        %v1728 = vsel %vm1133, %v1713, 0
        %v1731 = vsel %vm1133, %v1714, 0
        %v1734 = vsel %vm1133, %v1715, 0
        %v1737 = vsel %vm1133, %v1716, 0
        %v1740 = vsel %vm1133, %v1717, 0
        %1742 = vmatprep.subr.mxu0 0.0
        %1743 = vmatpush1.msra.mxu0 0.0
        %1744 = vmatprep.subr.mxu0 0.0
        %1745 = vmatpush1.msra.mxu0 0.0
        %1746 = vmatprep.subr.mxu0 0.0
        %1747 = vmatpush1.msra.mxu0 0.0
        %1748 = vmatprep.subr.mxu0 0.0
        %1749 = vmatpush1.msra.mxu0 0.0
        %1750 = vmatprep.subr.mxu0 0.0
        %1751 = vmatpush1.msra.mxu0 0.0
        %1752 = vmatprep.subr.mxu0 0.0
        %1753 = vmatpush1.msra.mxu0 0.0
        %1754 = vmatprep.subr.mxu0 0.0
        %1755 = vmatpush1.msra.mxu0 0.0
        %1756 = vmatprep.subr.mxu0 0.0
        %1757 = vmatpush1.msra.mxu0 0.0
        %1758 = vmatprep.subr.mxu0 0.0
        %1759 = vmatpush1.msra.mxu0 %v1072
        %1760 = vmatprep.subr.mxu0 0.0
        %1761 = vmatpush1.msra.mxu0 %v1071
        %1762 = vmatprep.subr.mxu0 0.0
        %1763 = vmatpush1.msra.mxu0 %v1070
        %1764 = vmatprep.subr.mxu0 0.0
        %1765 = vmatpush1.msra.mxu0 %v1069
        %1766 = vmatprep.subr.mxu0 0.0
        %1767 = vmatpush1.msra.mxu0 %v1068
        %1768 = vmatprep.subr.mxu0 0.0
        %1769 = vmatpush1.msra.mxu0 %v1067
        %1770 = vmatprep.subr.mxu0 0.0
        %1771 = vmatpush1.msra.mxu0 %v1066
        %1772 = vmatprep.subr.mxu0 0.0
        %1773 = vmatpush1.msra.mxu0 %v1065
        %1774 = vmatprep.subr.mxu0 0.0
        %1775 = vmatpush2.msra.mxu0 0.0
        %1776 = vmatprep.subr.mxu0 0.0
        %1777 = vmatpush2.msra.mxu0 0.0
        %1778 = vmatprep.subr.mxu0 0.0
        %1779 = vmatpush2.msra.mxu0 0.0
        %1780 = vmatprep.subr.mxu0 0.0
        %1781 = vmatpush2.msra.mxu0 0.0
        %1782 = vmatprep.subr.mxu0 0.0
        %1783 = vmatpush2.msra.mxu0 0.0
        %1784 = vmatprep.subr.mxu0 0.0
        %1785 = vmatpush2.msra.mxu0 0.0
        %1786 = vmatprep.subr.mxu0 0.0
        %1787 = vmatpush2.msra.mxu0 0.0
        %1788 = vmatprep.subr.mxu0 0.0
        %1789 = vmatpush2.msra.mxu0 0.0
        %1790 = vmatprep.subr.mxu0 0.0
        %1791 = vmatpush2.msra.mxu0 0.0
        %1792 = vmatprep.subr.mxu0 0.0
        %1793 = vmatpush2.msra.mxu0 0.0
        %1794 = vmatprep.subr.mxu0 0.0
        %1795 = vmatpush2.msra.mxu0 0.0
        %1796 = vmatprep.subr.mxu0 0.0
        %1797 = vmatpush2.msra.mxu0 0.0
        %1798 = vmatprep.subr.mxu0 0.0
        %1799 = vmatpush2.msra.mxu0 0.0
        %1800 = vmatprep.subr.mxu0 0.0
        %1801 = vmatpush2.msra.mxu0 0.0
        %1802 = vmatprep.subr.mxu0 0.0
        %1803 = vmatpush2.msra.mxu0 0.0
        %1804 = vmatprep.subr.mxu0 0.0
        %1805 = vmatpush2.msra.mxu0 0.0
        %1806 = vmatprep.mubr.f32.mxu0 0.0
        %1807 = vmatmul.mubr.f32.gmra.mxu0 %v1719
        %v1808 = vpop.f32.mrf.mxu0
        %v1809 = vadd.f32 0.0, %v1808
        %v1810 = vpop.f32.mrf.mxu0
        %1811 = vmatprep.mubr.f32.mxu0 0.0
        %1812 = vmatmul.mubr.f32.gmra.mxu0 %v1722
        %v1813 = vpop.f32.mrf.mxu0
        %v1814 = vadd.f32 0.0, %v1813
        %v1815 = vpop.f32.mrf.mxu0
        %1816 = vmatprep.mubr.f32.mxu0 0.0
        %1817 = vmatmul.mubr.f32.gmra.mxu0 %v1725
        %v1818 = vpop.f32.mrf.mxu0
        %v1819 = vadd.f32 0.0, %v1818
        %v1820 = vpop.f32.mrf.mxu0
        %1821 = vmatprep.mubr.f32.mxu0 0.0
        %1822 = vmatmul.mubr.f32.gmra.mxu0 %v1728
        %v1823 = vpop.f32.mrf.mxu0
        %v1824 = vadd.f32 0.0, %v1823
        %v1825 = vpop.f32.mrf.mxu0
        %1826 = vmatprep.mubr.f32.mxu0 0.0
        %1827 = vmatmul.mubr.f32.gmra.mxu0 %v1731
        %v1828 = vpop.f32.mrf.mxu0
        %v1829 = vadd.f32 0.0, %v1828
        %v1830 = vpop.f32.mrf.mxu0
        %1831 = vmatprep.mubr.f32.mxu0 0.0
        %1832 = vmatmul.mubr.f32.gmra.mxu0 %v1734
        %v1833 = vpop.f32.mrf.mxu0
        %v1834 = vadd.f32 0.0, %v1833
        %v1835 = vpop.f32.mrf.mxu0
        %1836 = vmatprep.mubr.f32.mxu0 0.0
        %1837 = vmatmul.mubr.f32.gmra.mxu0 %v1737
        %v1838 = vpop.f32.mrf.mxu0
        %v1839 = vadd.f32 0.0, %v1838
        %v1840 = vpop.f32.mrf.mxu0
        %1841 = vmatprep.mubr.f32.mxu0 0.0
        %1842 = vmatmul.mubr.f32.gmra.mxu0 %v1740
        %v1843 = vpop.f32.mrf.mxu0
        %v1844 = vadd.f32 0.0, %v1843
        %v1845 = vpop.f32.mrf.mxu0
        %1846 = vdwg.mxu0
        %v1847 = vstv %s1680
        %v1848 = vmul.f32 %v1847, %v1809
        %v1849 = vmul.f32 %v1847, %v1814
        %v1850 = vmul.f32 %v1847, %v1819
        %v1851 = vmul.f32 %v1847, %v1824
        %v1852 = vmul.f32 %v1847, %v1829
        %v1853 = vmul.f32 %v1847, %v1834
        %v1854 = vmul.f32 %v1847, %v1839
        %v1855 = vmul.f32 %v1847, %v1844
        %v1856 = vadd.f32 %v1848, %v1065
        %v1857 = vadd.f32 %v1849, %v1066
        %v1858 = vadd.f32 %v1850, %v1067
        %v1859 = vadd.f32 %v1851, %v1068
        %v1860 = vadd.f32 %v1852, %v1069
        %v1861 = vadd.f32 %v1853, %v1070
        %v1862 = vadd.f32 %v1854, %v1071
        %v1863 = vadd.f32 %v1855, %v1072
        %v1864 = vadd.f32 %v1702, %v1856
        %v1865 = vadd.f32 %v1703, %v1857
        %v1866 = vadd.f32 %v1704, %v1858
        %v1867 = vadd.f32 %v1705, %v1859
        %v1868 = vadd.f32 %v1706, %v1860
        %v1869 = vadd.f32 %v1707, %v1861
        %v1870 = vadd.f32 %v1708, %v1862
        %v1871 = vadd.f32 %v1709, %v1863
        %v1872 = vxor.u32 %v1864, 2147483648
        %v1873 = vxor.u32 %v1865, 2147483648
        %v1874 = vxor.u32 %v1866, 2147483648
        %v1875 = vxor.u32 %v1867, 2147483648
        %v1876 = vxor.u32 %v1868, 2147483648
        %v1877 = vxor.u32 %v1869, 2147483648
        %v1878 = vxor.u32 %v1870, 2147483648
        %v1879 = vxor.u32 %v1871, 2147483648
        %v1880 = vmul.f32 %v1872, 1.442695
        %v1881 = vpow.pop %v1880
        %v1882 = vmul.f32 %v1873, 1.442695
        %v1883 = vpow.pop %v1882
        %v1884 = vmul.f32 %v1874, 1.442695
        %v1885 = vpow.pop %v1884
        %v1886 = vmul.f32 %v1875, 1.442695
        %v1887 = vpow.pop %v1886
        %v1888 = vmul.f32 %v1876, 1.442695
        %v1889 = vpow.pop %v1888
        %v1890 = vmul.f32 %v1877, 1.442695
        %v1891 = vpow.pop %v1890
        %v1892 = vmul.f32 %v1878, 1.442695
        %v1893 = vpow.pop %v1892
        %v1894 = vmul.f32 %v1879, 1.442695
        %v1895 = vpow.pop %v1894
        %v1896 = vadd.f32 %v1881, 1.0
        %v1897 = vadd.f32 %v1883, 1.0
        %v1898 = vadd.f32 %v1885, 1.0
        %v1899 = vadd.f32 %v1887, 1.0
        %v1900 = vadd.f32 %v1889, 1.0
        %v1901 = vadd.f32 %v1891, 1.0
        %v1902 = vadd.f32 %v1893, 1.0
        %v1903 = vadd.f32 %v1895, 1.0
        %v1904 = vrcp.pop %v1896
        %v1905 = vmul.f32 1.0, %v1904
        %v1906 = vrcp.pop %v1897
        %v1907 = vmul.f32 1.0, %v1906
        %v1908 = vrcp.pop %v1898
        %v1909 = vmul.f32 1.0, %v1908
        %v1910 = vrcp.pop %v1899
        %v1911 = vmul.f32 1.0, %v1910
        %v1912 = vrcp.pop %v1900
        %v1913 = vmul.f32 1.0, %v1912
        %v1914 = vrcp.pop %v1901
        %v1915 = vmul.f32 1.0, %v1914
        %v1916 = vrcp.pop %v1902
        %v1917 = vmul.f32 1.0, %v1916
        %v1918 = vrcp.pop %v1903
        %v1919 = vmul.f32 1.0, %v1918
        %v1920 = vmul.f32 %v1065, %v1905
        %v1921 = vmul.f32 %v1066, %v1907
        %v1922 = vmul.f32 %v1067, %v1909
        %v1923 = vmul.f32 %v1068, %v1911
        %v1924 = vmul.f32 %v1069, %v1913
        %v1925 = vmul.f32 %v1070, %v1915
        %v1926 = vmul.f32 %v1071, %v1917
        %v1927 = vmul.f32 %v1072, %v1919
        %v1928 = vadd.f32 %v1065, %v1920
        %v1929 = vadd.f32 %v1066, %v1921
        %v1930 = vadd.f32 %v1067, %v1922
        %v1931 = vadd.f32 %v1068, %v1923
        %v1932 = vadd.f32 %v1069, %v1924
        %v1933 = vadd.f32 %v1070, %v1925
        %v1934 = vadd.f32 %v1071, %v1926
        %v1935 = vadd.f32 %v1072, %v1927
        %1936 = vst [vmem:[%s337] sm:$0xff] %v1928
        %1937 = vst [vmem:[%s337 + $0x8] sm:$0xff] %v1929
        %1938 = vst [vmem:[%s337 + $0x10] sm:$0xff] %v1930
        %1939 = vst [vmem:[%s337 + $0x18] sm:$0xff] %v1931
        %1940 = vst [vmem:[%s337 + $0x20] sm:$0xff] %v1932
        %1941 = vst [vmem:[%s337 + $0x28] sm:$0xff] %v1933
        %1942 = vst [vmem:[%s337 + $0x30] sm:$0xff] %v1934
        %1943 = vst [vmem:[%s337 + $0x38] sm:$0xff] %v1935
        %s1944 = sand.u32 %s238, 1
        %s1945 = sand.u32 %s238, 1
        %s1946 = smul.addr %s1945, 64
        %s1947 = scalar_lea.vmem [#allocation8], %s1946
        // Predicated region
        $region61: #{att_forward.1} parent=55 // pred_check
          %p1948 = pneg %p248
        $region62: #{att_forward.1} parent=55 // pred_check_branch
          %1950 = sbr.rel (%p1948) target = $region64
        $region63: #{att_forward.1} parent=55 // pred_region
          %s1951 = smul.addr %s26, 16
          %s1952 = sadd.s32 %s27, %s1951
          %s1953 = smul.addr %s1952, 8
          %s1954 = scalar_lea.vmem %s9, %s1953
          // Predicated region
          $region65: #{att_forward.1} parent=63 // pred_check
            _
          $region66: #{att_forward.1} parent=63 // pred_check_branch
            %1956 = sbr.rel (0) target = $region68
          $region67: #{att_forward.1} parent=63 // pred_region
            // Predicated region
            $region69: #{att_forward.1} parent=67 // pred_check
              _
            $region70: #{att_forward.1} parent=67 // pred_check_branch
              %1958 = sbr.rel (0) target = $region72
            $region71: #{att_forward.1} parent=67 // pred_region
              // Predicated region
              $region84: #{att_forward.1} parent=71 // pred_check
                _
              $region85: #{att_forward.1} parent=71 // pred_check_branch
                %1988 = sbr.rel (0) target = $region87
              $region86: #{att_forward.1} parent=71 // pred_region
                loop: start=0, step=1, limit=1
                $region88: #{att_forward.1} parent=86 // loop_pre_header
                  _
                $region89: #{att_forward.1} parent=86 // loop_header
                  %s1990 = sphi 0, %s1994
                  %p1991 = scmp.ge.s32.totalorder %s1990, 1
                  %s1995 = sphi %s1947, %s1947
                  %s1996 = sphi %s1954, %s1954
                $region90: #{att_forward.1} parent=86 // loop_header_branch
                  %1993 = sbr.rel (%p1991) target = $region94
                $region91: #{att_forward.1} parent=86 // loop_body
                  %v1997 = vld [vmem:[%s1995] sm:$0xff]
                  %1998 = vst [vmem:[%s1996] sm:$0xff] %v1997
                  %v1999 = vld [vmem:[%s1995 + $0x8] sm:$0xff]
                  %2000 = vst [vmem:[%s1996 + $0x10] sm:$0xff] %v1999
                  %v2001 = vld [vmem:[%s1995 + $0x10] sm:$0xff]
                  %2002 = vst [vmem:[%s1996 + $0x20] sm:$0xff] %v2001
                  %v2003 = vld [vmem:[%s1995 + $0x18] sm:$0xff]
                  %2004 = vst [vmem:[%s1996 + $0x30] sm:$0xff] %v2003
                  %v2005 = vld [vmem:[%s1995 + $0x20] sm:$0xff]
                  %2006 = vst [vmem:[%s1996 + $0x40] sm:$0xff] %v2005
                  %v2007 = vld [vmem:[%s1995 + $0x28] sm:$0xff]
                  %2008 = vst [vmem:[%s1996 + $0x50] sm:$0xff] %v2007
                  %v2009 = vld [vmem:[%s1995 + $0x30] sm:$0xff]
                  %2010 = vst [vmem:[%s1996 + $0x60] sm:$0xff] %v2009
                  %v2011 = vld [vmem:[%s1995 + $0x38] sm:$0xff]
                  %2012 = vst [vmem:[%s1996 + $0x70] sm:$0xff] %v2011
                $region92: #{att_forward.1} parent=86 // loop_footer
                  %s1994 = sadd.s32 1, %s1990
                $region93: #{att_forward.1} parent=86 // loop_footer_branch
                  %1989 = sbr.rel target = $region89
                $region94: #{att_forward.1} parent=86 // loop_exit
                  _
              $region87: #{att_forward.1} parent=71 // pred_fallthru
                _
              // Predicated region
              $region95: #{att_forward.1} parent=71 // pred_check
                _
              $region96: #{att_forward.1} parent=71 // pred_check_branch
                %2014 = sbr.rel target = $region98
              $region97: #{att_forward.1} parent=71 // pred_region
                _
              $region98: #{att_forward.1} parent=71 // pred_fallthru
                _
            $region72: #{att_forward.1} parent=67 // pred_fallthru
              _
            // Predicated region
            $region73: #{att_forward.1} parent=67 // pred_check
              _
            $region74: #{att_forward.1} parent=67 // pred_check_branch
              %1960 = sbr.rel target = $region76
            $region75: #{att_forward.1} parent=67 // pred_region
              %s1962 = ssub.s32 256, 1
              loop: start=0, step=1, limit=1
              $region77: #{att_forward.1} parent=75 // loop_pre_header
                _
              $region78: #{att_forward.1} parent=75 // loop_header
                %s1964 = sphi 0, %s1968
                %p1965 = scmp.ge.s32.totalorder %s1964, 1
                %s1969 = sphi %s1947, %s1947
                %s1970 = sphi %s1954, %s1954
              $region79: #{att_forward.1} parent=75 // loop_header_branch
                %1967 = sbr.rel (%p1965) target = $region83
              $region80: #{att_forward.1} parent=75 // loop_body
                %v1971 = vld [vmem:[%s1969] sm:%s1962]
                %1972 = vst [vmem:[%s1970] sm:%s1962] %v1971
                %v1973 = vld [vmem:[%s1969 + $0x8] sm:%s1962]
                %1974 = vst [vmem:[%s1970 + $0x10] sm:%s1962] %v1973
                %v1975 = vld [vmem:[%s1969 + $0x10] sm:%s1962]
                %1976 = vst [vmem:[%s1970 + $0x20] sm:%s1962] %v1975
                %v1977 = vld [vmem:[%s1969 + $0x18] sm:%s1962]
                %1978 = vst [vmem:[%s1970 + $0x30] sm:%s1962] %v1977
                %v1979 = vld [vmem:[%s1969 + $0x20] sm:%s1962]
                %1980 = vst [vmem:[%s1970 + $0x40] sm:%s1962] %v1979
                %v1981 = vld [vmem:[%s1969 + $0x28] sm:%s1962]
                %1982 = vst [vmem:[%s1970 + $0x50] sm:%s1962] %v1981
                %v1983 = vld [vmem:[%s1969 + $0x30] sm:%s1962]
                %1984 = vst [vmem:[%s1970 + $0x60] sm:%s1962] %v1983
                %v1985 = vld [vmem:[%s1969 + $0x38] sm:%s1962]
                %1986 = vst [vmem:[%s1970 + $0x70] sm:%s1962] %v1985
              $region81: #{att_forward.1} parent=75 // loop_footer
                %s1968 = sadd.s32 1, %s1964
              $region82: #{att_forward.1} parent=75 // loop_footer_branch
                %1963 = sbr.rel target = $region78
              $region83: #{att_forward.1} parent=75 // loop_exit
                _
            $region76: #{att_forward.1} parent=67 // pred_fallthru
              _
          $region68: #{att_forward.1} parent=63 // pred_fallthru
            _
          %2015 = vnop
        $region64: #{att_forward.1} parent=55 // pred_fallthru
          _
      $region56: #{att_forward.1} parent=5 // pred_fallthru
        _
      %p2016 = scmp.le.s32.totalorder 2, %s17
      // Predicated region
      $region99: #{att_forward.1} parent=5 // pred_check
        %p2017 = pneg %p2016
      $region100: #{att_forward.1} parent=5 // pred_check_branch
        %2019 = sbr.rel (%p2017) target = $region102
      $region101: #{att_forward.1} parent=5 // pred_region
        %s2020 = ssub.s32 %s17, 2
        // Predicated region
        $region103: #{att_forward.1} parent=101 // pred_check
          %p2021 = pneg %p254
        $region104: #{att_forward.1} parent=101 // pred_check_branch
          %2023 = sbr.rel (%p2021) target = $region106
        $region105: #{att_forward.1} parent=101 // pred_region
          %s2024 = sand.u32 %s239, 1
          %s2025 = sand.u32 %s239, 1
          %s2026 = smul.addr %s2025, 64
          %s2027 = scalar_lea.vmem [#allocation8], %s2026
        $region106: #{att_forward.1} parent=101 // pred_fallthru
          _
      $region102: #{att_forward.1} parent=5 // pred_fallthru
        _
    $region6: #{att_forward.1} parent=1 // loop_footer
      %s21 = sadd.s32 1, %s17
    $region7: #{att_forward.1} parent=1 // loop_footer_branch
      %16 = sbr.rel target = $region3
    $region8: #{att_forward.1} parent=1 // loop_exit
      _

</llo_original>
